<compile_context>
chip_gen: v6e
topology: v6e:2x2x1
jax: 0.10.0
libtpu: 0.0.40
codegen_flags: <defaults>
</compile_context>

<pallas_src>
import functools

import jax
import jax.numpy as jnp
from jax.experimental import pallas as pl
from jax.experimental.pallas import tpu as pltpu


LANE = 128   # vreg lane width
SUBG = 16    # bf16 sublane pack granularity for the batch axis


def _round_up(x, m):
    return (x + m - 1) // m * m


def _vmem_capacity_bytes():
    """Per-core VMEM capacity; conservative 64 MiB if the query fails."""
    try:
        info = pltpu.get_tpu_info()
        cap = getattr(info, "vmem_capacity_bytes", None)
        if cap:
            return int(cap)
    except Exception:
        pass
    return 64 * 1024 * 1024


def _choose_batch_tile(batch, max_tb):
    """Pick (tile_batch, padded_batch): <=10% pad waste, >=2 grid steps if possible."""
    pb_min = _round_up(batch, SUBG)
    tb = _round_up(min(max_tb, pb_min), SUBG)
    # Shrink while batch padding waste exceeds 10%.
    while tb > SUBG and (_round_up(batch, tb) - batch) * 10 > _round_up(batch, tb):
        tb -= SUBG
    # Prefer >= 2 grid steps so a 2-TC chip (v7x) can shard the parallel axis.
    if pb_min > SUBG and _round_up(batch, tb) // tb < 2:
        tb = max(SUBG, min(tb, _round_up(pb_min // 2, SUBG)))
    pb = _round_up(batch, tb)
    return tb, pb


def _pick_divisor_tile(dim, cap):
    """Largest multiple of 128 <= cap that divides dim (dim is a 128-multiple)."""
    t = max(LANE, min(cap, dim) // LANE * LANE)
    while dim % t:
        t -= LANE
    return t


# --------------------------------------------------------------------------
# Fused kernel: whole 4-layer MLP on one (tb, d_in) batch tile, weights resident.
# --------------------------------------------------------------------------
def mlp_kernel(x_ref,
               w1_ref, b1_ref,
               w2_ref, b2_ref,
               w3_ref, b3_ref,
               w4_ref, b4_ref,
               o_ref):
    x = x_ref[...]  # already bf16 from the wrapper

    h = jnp.dot(x, w1_ref[...], preferred_element_type=jnp.float32) + b1_ref[...]
    h = jnp.maximum(h, 0.0)

    h = jnp.dot(h.astype(jnp.bfloat16), w2_ref[...],
                preferred_element_type=jnp.float32) + b2_ref[...]
    h = jnp.maximum(h, 0.0)

    h = jnp.dot(h.astype(jnp.bfloat16), w3_ref[...],
                preferred_element_type=jnp.float32) + b3_ref[...]
    h = jnp.maximum(h, 0.0)

    out = jnp.dot(h.astype(jnp.bfloat16), w4_ref[...],
                  preferred_element_type=jnp.float32) + b4_ref[...]
    o_ref[...] = out.astype(o_ref.dtype)  # lane-dense (tb, 128k) store


# --------------------------------------------------------------------------
# Fallback kernel: one tiled Linear(+ReLU) layer (used when the resident-weight
# strategy does not fit VMEM, e.g. very large hidden dims on v7x).
# --------------------------------------------------------------------------
def _linear_kernel(x_ref, w_ref, b_ref, o_ref, acc_ref, *, relu):
    k = pl.program_id(2)

    @pl.when(k == 0)
    def _():
        acc_ref[...] = jnp.zeros_like(acc_ref)

    acc_ref[...] += jnp.dot(x_ref[...], w_ref[...],
                            preferred_element_type=jnp.float32)

    @pl.when(k == pl.num_programs(2) - 1)
    def _():
        out = acc_ref[...] + b_ref[...]
        if relu:
            out = jnp.maximum(out, 0.0)
        o_ref[...] = out.astype(o_ref.dtype)


def _linear_pallas(x, w, b, *, relu, out_dtype, tm, vmem_limit):
    m, k_dim = x.shape
    n_dim = w.shape[1]
    tk = _pick_divisor_tile(k_dim, 512)
    tn = _pick_divisor_tile(n_dim, 512)
    flops = 2 * m * k_dim * n_dim
    bytes_accessed = (x.size * x.dtype.itemsize + w.size * w.dtype.itemsize
                      + b.size * 4 + m * n_dim * jnp.dtype(out_dtype).itemsize)
    return pl.pallas_call(
        functools.partial(_linear_kernel, relu=relu),
        out_shape=jax.ShapeDtypeStruct((m, n_dim), out_dtype),
        grid=(m // tm, n_dim // tn, k_dim // tk),
        in_specs=[
            pl.BlockSpec((tm, tk), lambda i, j, k: (i, k)),
            pl.BlockSpec((tk, tn), lambda i, j, k: (k, j)),
            pl.BlockSpec((1, tn), lambda i, j, k: (0, j)),
        ],
        out_specs=pl.BlockSpec((tm, tn), lambda i, j, k: (i, j)),
        scratch_shapes=[pltpu.VMEM((tm, tn), jnp.float32)],
        compiler_params=pltpu.CompilerParams(
            dimension_semantics=("parallel", "parallel", "arbitrary"),
            vmem_limit_bytes=vmem_limit),
        cost_estimate=pl.CostEstimate(
            flops=flops, transcendentals=0, bytes_accessed=bytes_accessed),
    )(x, w, b)


# --------------------------------------------------------------------------
# Parameter preprocessing (done ONCE, not per forward call).
# --------------------------------------------------------------------------
def prepare_params(params):
    """Pad feature dims to 128-multiples and cast weights to bf16, once."""
    (w1, b1), (w2, b2), (w3, b3), (w4, b4) = params
    input_dim = w1.shape[0]
    hidden_dim = w1.shape[1]
    output_dim = w4.shape[1]
    d_in = _round_up(input_dim, LANE)
    d_h = _round_up(hidden_dim, LANE)
    d_out = _round_up(output_dim, LANE)

    def pad2(a, rows, cols):
        return jnp.pad(a, ((0, rows - a.shape[0]), (0, cols - a.shape[1])))

    weights = (
        pad2(w1, d_in, d_h).astype(jnp.bfloat16),
        pad2(w2, d_h, d_h).astype(jnp.bfloat16),
        pad2(w3, d_h, d_h).astype(jnp.bfloat16),
        pad2(w4, d_h, d_out).astype(jnp.bfloat16),
    )
    biases = tuple(
        pad2(jnp.reshape(b, (1, -1)), 1, c).astype(jnp.float32)
        for b, c in ((b1, d_h), (b2, d_h), (b3, d_h), (b4, d_out))
    )
    return {"weights": weights, "biases": biases, "output_dim": output_dim}


def _resident_spec(shape, single_buffer):
    # Constant-index full-array block: stays in VMEM across all grid steps.
    index_map = lambda i: (0,) * len(shape)
    if single_buffer:
        return pl.BlockSpec(shape, index_map, pipeline_mode=pl.Buffered(1))
    return pl.BlockSpec(shape, index_map)


@functools.partial(jax.jit,
                   static_argnames=("output_dim", "block_batch",
                                    "single_buffer_weights"))
def _mlp_forward_impl(x, weights, biases, *, output_dim, block_batch=None,
                      single_buffer_weights=True):
    w1p, w2p, w3p, w4p = weights
    b1p, b2p, b3p, b4p = biases
    batch, input_dim = x.shape
    d_in, d_h = w1p.shape
    d_out = w4p.shape[1]

    vmem_cap = _vmem_capacity_bytes()
    vmem_limit = int(vmem_cap * 0.85)

    if block_batch is None:
        # Bigger batch tiles on 128-MiB-VMEM chips (v5e/v6e); 256 on v7x.
        block_batch = 512 if vmem_cap >= 100 * 1024 * 1024 else 256

    tb, pb = _choose_batch_tile(batch, block_batch)

    # Pad + cast x once (bf16 halves the per-step input DMA).
    xp = jnp.pad(x, ((0, pb - batch), (0, d_in - input_dim))).astype(jnp.bfloat16)

    # VMEM budget for the fully fused, all-weights-resident path.
    wbuf = 1 if single_buffer_weights else 2
    weight_bytes = wbuf * 2 * (d_in * d_h + 2 * d_h * d_h + d_h * d_out)
    bias_bytes = wbuf * 4 * (3 * d_h + d_out)
    io_bytes = 2 * (tb * d_in * 2 + tb * d_out * 4)  # double-buffered x/out tiles
    act_bytes = 10 * tb * d_h                        # f32 h + bf16 copy + next acc
    fits = weight_bytes + bias_bytes + io_bytes + act_bytes <= (2 * vmem_cap) // 3

    if fits:
        flops = 2 * pb * (d_in * d_h + 2 * d_h * d_h + d_h * d_out)
        bytes_accessed = (
            xp.size * 2
            + (w1p.size + w2p.size + w3p.size + w4p.size) * 2
            + (b1p.size + b2p.size + b3p.size + b4p.size) * 4
            + pb * d_out * 4
        )
        out_padded = pl.pallas_call(
            mlp_kernel,
            out_shape=jax.ShapeDtypeStruct((pb, d_out), jnp.float32),
            grid=(pb // tb,),
            in_specs=[
                pl.BlockSpec((tb, d_in), lambda i: (i, 0)),
                _resident_spec(w1p.shape, single_buffer_weights),
                _resident_spec(b1p.shape, single_buffer_weights),
                _resident_spec(w2p.shape, single_buffer_weights),
                _resident_spec(b2p.shape, single_buffer_weights),
                _resident_spec(w3p.shape, single_buffer_weights),
                _resident_spec(b3p.shape, single_buffer_weights),
                _resident_spec(w4p.shape, single_buffer_weights),
                _resident_spec(b4p.shape, single_buffer_weights),
            ],
            out_specs=pl.BlockSpec((tb, d_out), lambda i: (i, 0)),
            compiler_params=pltpu.CompilerParams(
                dimension_semantics=("parallel",),
                vmem_limit_bytes=vmem_limit),
            cost_estimate=pl.CostEstimate(
                flops=flops, transcendentals=0, bytes_accessed=bytes_accessed),
        )(xp, w1p, b1p, w2p, b2p, w3p, b3p, w4p, b4p)
    else:
        # Weights too large to keep resident (e.g. v7x 64 MiB/TC): stream them
        # through per-layer tiled matmul kernels instead.
        h = xp
        layers = ((w1p, b1p, True), (w2p, b2p, True),
                  (w3p, b3p, True), (w4p, b4p, False))
        for w, b, relu in layers:
            out_dtype = jnp.bfloat16 if relu else jnp.float32
            h = _linear_pallas(h, w, b, relu=relu, out_dtype=out_dtype,
                               tm=tb, vmem_limit=vmem_limit)
        out_padded = h

    return out_padded[:batch, :output_dim]


def mlp_forward(x, prepared, block_batch=None):
    kwargs = dict(output_dim=prepared["output_dim"], block_batch=block_batch)
    try:
        return _mlp_forward_impl(x, prepared["weights"], prepared["biases"],
                                 single_buffer_weights=True, **kwargs)
    except Exception:
        # Safety net if this jax build rejects pipeline_mode=Buffered(1):
        # retry with default (double-buffered) resident blocks.
        return _mlp_forward_impl(x, prepared["weights"], prepared["biases"],
                                 single_buffer_weights=False, **kwargs)


# --------------------------------------------------------------------------
# Init + references
# --------------------------------------------------------------------------
def init_linear(key, in_features, out_features):
    # PyTorch nn.Linear default init: U(-1/sqrt(in), 1/sqrt(in)) for W and b.
    kw, kb = jax.random.split(key)
    bound = 1.0 / jnp.sqrt(jnp.float32(in_features))
    # Stored as [in, out] (transposed relative to PyTorch's [out, in]).
    w = jax.random.uniform(kw, (in_features, out_features), jnp.float32,
                           minval=-bound, maxval=bound)
    b = jax.random.uniform(kb, (1, out_features), jnp.float32,
                           minval=-bound, maxval=bound)
    return w, b


def ref_forward_bf16(x, params):
    # Mirrors the kernel's numerics: bf16 dot inputs, f32 accumulation.
    h = x.astype(jnp.bfloat16)
    for i, (w, b) in enumerate(params):
        h = jnp.dot(h.astype(jnp.bfloat16), w.astype(jnp.bfloat16),
                    preferred_element_type=jnp.float32) + b
        if i < 3:
            h = jnp.maximum(h, 0.0)
    return h


def ref_forward_f32(x, params):
    h = x
    for i, (w, b) in enumerate(params):
        h = h @ w + b
        if i < 3:
            h = jnp.maximum(h, 0.0)
    return h


if __name__ == "__main__":
    input_dim, hidden_dim, output_dim = 32, 32, 16
    batch = 8

    root = jax.random.PRNGKey(0)
    kx, k1, k2, k3, k4 = jax.random.split(root, 5)

    x = jax.random.normal(kx, (batch, input_dim), jnp.float32)
    params = (
        init_linear(k1, input_dim, hidden_dim),
        init_linear(k2, hidden_dim, hidden_dim),
        init_linear(k3, hidden_dim, hidden_dim),
        init_linear(k4, hidden_dim, output_dim),
    )

    prepared = prepare_params(params)   # pad + bf16-cast weights ONCE
    out = mlp_forward(x, prepared)
    jax.block_until_ready(out)
    assert out.shape == (batch, output_dim)

    # Check against a bf16-matched reference (tight) and f32 reference (loose,
    # bf16 dot inputs cost ~0.4% relative precision).
    ref_bf16 = ref_forward_bf16(x, params)
    ref_f32 = ref_forward_f32(x, params)
    assert jnp.allclose(out, ref_bf16, atol=1e-4, rtol=1e-4), "bf16-ref mismatch"
    assert jnp.allclose(out, ref_f32, atol=5e-2, rtol=5e-2), "f32-ref mismatch"

    print("KERNEL_OK")
</pallas_src>

<mosaic_0001>
module attributes {stable_mosaic.version = 11 : i64} {
  func.func @mlp_kernel(%arg0: i32, %arg1: memref<16x128xbf16, #tpu.memory_space<vmem>>, %arg2: memref<128x128xbf16, #tpu.memory_space<vmem>>, %arg3: memref<1x128xf32, #tpu.memory_space<vmem>>, %arg4: memref<128x128xbf16, #tpu.memory_space<vmem>>, %arg5: memref<1x128xf32, #tpu.memory_space<vmem>>, %arg6: memref<128x128xbf16, #tpu.memory_space<vmem>>, %arg7: memref<1x128xf32, #tpu.memory_space<vmem>>, %arg8: memref<128x128xbf16, #tpu.memory_space<vmem>>, %arg9: memref<1x128xf32, #tpu.memory_space<vmem>>, %arg10: memref<16x128xf32, #tpu.memory_space<vmem>>) attributes {dimension_semantics = [#tpu.dimension_semantics<parallel>], iteration_bounds = array<i64: 1>, scalar_prefetch = 0 : i64, scratch_operands = 0 : i64, tpu.core_type = #tpu.core_type<tc>, window_params = [{transform_indices = @transform_0, window_bounds = array<i64: 16, 128>}, {pipeline_mode = #tpu.pipeline_mode<synchronous>, transform_indices = @transform_1, window_bounds = array<i64: 128, 128>}, {pipeline_mode = #tpu.pipeline_mode<synchronous>, transform_indices = @transform_2, window_bounds = array<i64: 1, 128>}, {pipeline_mode = #tpu.pipeline_mode<synchronous>, transform_indices = @transform_3, window_bounds = array<i64: 128, 128>}, {pipeline_mode = #tpu.pipeline_mode<synchronous>, transform_indices = @transform_4, window_bounds = array<i64: 1, 128>}, {pipeline_mode = #tpu.pipeline_mode<synchronous>, transform_indices = @transform_5, window_bounds = array<i64: 128, 128>}, {pipeline_mode = #tpu.pipeline_mode<synchronous>, transform_indices = @transform_6, window_bounds = array<i64: 1, 128>}, {pipeline_mode = #tpu.pipeline_mode<synchronous>, transform_indices = @transform_7, window_bounds = array<i64: 128, 128>}, {pipeline_mode = #tpu.pipeline_mode<synchronous>, transform_indices = @transform_8, window_bounds = array<i64: 1, 128>}, {transform_indices = @transform_9, window_bounds = array<i64: 16, 128>}]} {
    %c0 = arith.constant 0 : index
    %c0_0 = arith.constant 0 : index
    %0 = vector.load %arg1[%c0, %c0_0] : memref<16x128xbf16, #tpu.memory_space<vmem>>, vector<16x128xbf16>
    %c0_1 = arith.constant 0 : index
    %c0_2 = arith.constant 0 : index
    %1 = vector.load %arg2[%c0_1, %c0_2] : memref<128x128xbf16, #tpu.memory_space<vmem>>, vector<128x128xbf16>
    %cst = arith.constant dense<0.000000e+00> : vector<16x128xf32>
    %2 = tpu.matmul %0, %1, %cst {dimension_numbers = #tpu.dot_dimension_numbers<[1], [0], [0], [1], [0, 0, 1, 1], [], []>} : vector<16x128xbf16>, vector<128x128xbf16>, vector<16x128xf32> -> vector<16x128xf32>
    %c0_3 = arith.constant 0 : index
    %c0_4 = arith.constant 0 : index
    %3 = vector.load %arg3[%c0_3, %c0_4] : memref<1x128xf32, #tpu.memory_space<vmem>>, vector<1x128xf32>
    %4 = vector.broadcast %3 : vector<1x128xf32> to vector<16x128xf32>
    %5 = arith.addf %2, %4 : vector<16x128xf32>
    %cst_5 = arith.constant 0.000000e+00 : f32
    %6 = vector.broadcast %cst_5 : f32 to vector<16x128xf32>
    %7 = arith.maximumf %5, %6 : vector<16x128xf32>
    %8 = arith.truncf %7 : vector<16x128xf32> to vector<16x128xbf16>
    %c0_6 = arith.constant 0 : index
    %c0_7 = arith.constant 0 : index
    %9 = vector.load %arg4[%c0_6, %c0_7] : memref<128x128xbf16, #tpu.memory_space<vmem>>, vector<128x128xbf16>
    %cst_8 = arith.constant dense<0.000000e+00> : vector<16x128xf32>
    %10 = tpu.matmul %8, %9, %cst_8 {dimension_numbers = #tpu.dot_dimension_numbers<[1], [0], [0], [1], [0, 0, 1, 1], [], []>} : vector<16x128xbf16>, vector<128x128xbf16>, vector<16x128xf32> -> vector<16x128xf32>
    %c0_9 = arith.constant 0 : index
    %c0_10 = arith.constant 0 : index
    %11 = vector.load %arg5[%c0_9, %c0_10] : memref<1x128xf32, #tpu.memory_space<vmem>>, vector<1x128xf32>
    %12 = vector.broadcast %11 : vector<1x128xf32> to vector<16x128xf32>
    %13 = arith.addf %10, %12 : vector<16x128xf32>
    %cst_11 = arith.constant 0.000000e+00 : f32
    %14 = vector.broadcast %cst_11 : f32 to vector<16x128xf32>
    %15 = arith.maximumf %13, %14 : vector<16x128xf32>
    %16 = arith.truncf %15 : vector<16x128xf32> to vector<16x128xbf16>
    %c0_12 = arith.constant 0 : index
    %c0_13 = arith.constant 0 : index
    %17 = vector.load %arg6[%c0_12, %c0_13] : memref<128x128xbf16, #tpu.memory_space<vmem>>, vector<128x128xbf16>
    %cst_14 = arith.constant dense<0.000000e+00> : vector<16x128xf32>
    %18 = tpu.matmul %16, %17, %cst_14 {dimension_numbers = #tpu.dot_dimension_numbers<[1], [0], [0], [1], [0, 0, 1, 1], [], []>} : vector<16x128xbf16>, vector<128x128xbf16>, vector<16x128xf32> -> vector<16x128xf32>
    %c0_15 = arith.constant 0 : index
    %c0_16 = arith.constant 0 : index
    %19 = vector.load %arg7[%c0_15, %c0_16] : memref<1x128xf32, #tpu.memory_space<vmem>>, vector<1x128xf32>
    %20 = vector.broadcast %19 : vector<1x128xf32> to vector<16x128xf32>
    %21 = arith.addf %18, %20 : vector<16x128xf32>
    %cst_17 = arith.constant 0.000000e+00 : f32
    %22 = vector.broadcast %cst_17 : f32 to vector<16x128xf32>
    %23 = arith.maximumf %21, %22 : vector<16x128xf32>
    %24 = arith.truncf %23 : vector<16x128xf32> to vector<16x128xbf16>
    %c0_18 = arith.constant 0 : index
    %c0_19 = arith.constant 0 : index
    %25 = vector.load %arg8[%c0_18, %c0_19] : memref<128x128xbf16, #tpu.memory_space<vmem>>, vector<128x128xbf16>
    %cst_20 = arith.constant dense<0.000000e+00> : vector<16x128xf32>
    %26 = tpu.matmul %24, %25, %cst_20 {dimension_numbers = #tpu.dot_dimension_numbers<[1], [0], [0], [1], [0, 0, 1, 1], [], []>} : vector<16x128xbf16>, vector<128x128xbf16>, vector<16x128xf32> -> vector<16x128xf32>
    %c0_21 = arith.constant 0 : index
    %c0_22 = arith.constant 0 : index
    %27 = vector.load %arg9[%c0_21, %c0_22] : memref<1x128xf32, #tpu.memory_space<vmem>>, vector<1x128xf32>
    %28 = vector.broadcast %27 : vector<1x128xf32> to vector<16x128xf32>
    %29 = arith.addf %26, %28 : vector<16x128xf32>
    %c0_23 = arith.constant 0 : index
    %c0_24 = arith.constant 0 : index
    %30 = vector.load %arg10[%c0_23, %c0_24] : memref<16x128xf32, #tpu.memory_space<vmem>>, vector<16x128xf32>
    tpu.vector_store %arg10[%c0_23, %c0_24], %29 {strides = array<i32>} : memref<16x128xf32, #tpu.memory_space<vmem>>, vector<16x128xf32>,
    return
  }
  func.func @transform_0(%arg0: i32) -> (i32, i32) {
    %c0_i32 = arith.constant 0 : i32
    %c0_i32_0 = arith.constant 0 : i32
    return %arg0, %c0_i32 : i32, i32
  }
  func.func @transform_1(%arg0: i32) -> (i32, i32) {
    %c0_i32 = arith.constant 0 : i32
    %c0_i32_0 = arith.constant 0 : i32
    %c0_i32_1 = arith.constant 0 : i32
    return %c0_i32, %c0_i32_0 : i32, i32
  }
  func.func @transform_2(%arg0: i32) -> (i32, i32) {
    %c0_i32 = arith.constant 0 : i32
    %c0_i32_0 = arith.constant 0 : i32
    %c0_i32_1 = arith.constant 0 : i32
    return %c0_i32, %c0_i32_0 : i32, i32
  }
  func.func @transform_3(%arg0: i32) -> (i32, i32) {
    %c0_i32 = arith.constant 0 : i32
    %c0_i32_0 = arith.constant 0 : i32
    %c0_i32_1 = arith.constant 0 : i32
    return %c0_i32, %c0_i32_0 : i32, i32
  }
  func.func @transform_4(%arg0: i32) -> (i32, i32) {
    %c0_i32 = arith.constant 0 : i32
    %c0_i32_0 = arith.constant 0 : i32
    %c0_i32_1 = arith.constant 0 : i32
    return %c0_i32, %c0_i32_0 : i32, i32
  }
  func.func @transform_5(%arg0: i32) -> (i32, i32) {
    %c0_i32 = arith.constant 0 : i32
    %c0_i32_0 = arith.constant 0 : i32
    %c0_i32_1 = arith.constant 0 : i32
    return %c0_i32, %c0_i32_0 : i32, i32
  }
  func.func @transform_6(%arg0: i32) -> (i32, i32) {
    %c0_i32 = arith.constant 0 : i32
    %c0_i32_0 = arith.constant 0 : i32
    %c0_i32_1 = arith.constant 0 : i32
    return %c0_i32, %c0_i32_0 : i32, i32
  }
  func.func @transform_7(%arg0: i32) -> (i32, i32) {
    %c0_i32 = arith.constant 0 : i32
    %c0_i32_0 = arith.constant 0 : i32
    %c0_i32_1 = arith.constant 0 : i32
    return %c0_i32, %c0_i32_0 : i32, i32
  }
  func.func @transform_8(%arg0: i32) -> (i32, i32) {
    %c0_i32 = arith.constant 0 : i32
    %c0_i32_0 = arith.constant 0 : i32
    %c0_i32_1 = arith.constant 0 : i32
    return %c0_i32, %c0_i32_0 : i32, i32
  }
  func.func @transform_9(%arg0: i32) -> (i32, i32) {
    %c0_i32 = arith.constant 0 : i32
    %c0_i32_0 = arith.constant 0 : i32
    return %arg0, %c0_i32 : i32, i32
  }
}

module attributes {stable_mosaic.version = 11 : i64} {
  func.func @mlp_kernel(%arg0: i32, %arg1: memref<16x128xbf16, #tpu.memory_space<vmem>>, %arg2: memref<128x128xbf16, #tpu.memory_space<vmem>>, %arg3: memref<1x128xf32, #tpu.memory_space<vmem>>, %arg4: memref<128x128xbf16, #tpu.memory_space<vmem>>, %arg5: memref<1x128xf32, #tpu.memory_space<vmem>>, %arg6: memref<128x128xbf16, #tpu.memory_space<vmem>>, %arg7: memref<1x128xf32, #tpu.memory_space<vmem>>, %arg8: memref<128x128xbf16, #tpu.memory_space<vmem>>, %arg9: memref<1x128xf32, #tpu.memory_space<vmem>>, %arg10: memref<16x128xf32, #tpu.memory_space<vmem>>) attributes {dimension_semantics = [#tpu.dimension_semantics<parallel>], iteration_bounds = array<i64: 1>, scalar_prefetch = 0 : i64, scratch_operands = 0 : i64, tpu.core_type = #tpu.core_type<tc>, window_params = [{transform_indices = @transform_0, window_bounds = array<i64: 16, 128>}, {pipeline_mode = #tpu.pipeline_mode<synchronous>, transform_indices = @transform_1, window_bounds = array<i64: 128, 128>}, {pipeline_mode = #tpu.pipeline_mode<synchronous>, transform_indices = @transform_2, window_bounds = array<i64: 1, 128>}, {pipeline_mode = #tpu.pipeline_mode<synchronous>, transform_indices = @transform_3, window_bounds = array<i64: 128, 128>}, {pipeline_mode = #tpu.pipeline_mode<synchronous>, transform_indices = @transform_4, window_bounds = array<i64: 1, 128>}, {pipeline_mode = #tpu.pipeline_mode<synchronous>, transform_indices = @transform_5, window_bounds = array<i64: 128, 128>}, {pipeline_mode = #tpu.pipeline_mode<synchronous>, transform_indices = @transform_6, window_bounds = array<i64: 1, 128>}, {pipeline_mode = #tpu.pipeline_mode<synchronous>, transform_indices = @transform_7, window_bounds = array<i64: 128, 128>}, {pipeline_mode = #tpu.pipeline_mode<synchronous>, transform_indices = @transform_8, window_bounds = array<i64: 1, 128>}, {transform_indices = @transform_9, window_bounds = array<i64: 16, 128>}]} {
    %c0 = arith.constant 0 : index
    %c0_0 = arith.constant 0 : index
    %0 = vector.load %arg1[%c0, %c0_0] : memref<16x128xbf16, #tpu.memory_space<vmem>>, vector<16x128xbf16>
    %c0_1 = arith.constant 0 : index
    %c0_2 = arith.constant 0 : index
    %1 = vector.load %arg2[%c0_1, %c0_2] : memref<128x128xbf16, #tpu.memory_space<vmem>>, vector<128x128xbf16>
    %cst = arith.constant dense<0.000000e+00> : vector<16x128xf32>
    %2 = tpu.matmul %0, %1, %cst {dimension_numbers = #tpu.dot_dimension_numbers<[1], [0], [0], [1], [0, 0, 1, 1], [], []>} : vector<16x128xbf16>, vector<128x128xbf16>, vector<16x128xf32> -> vector<16x128xf32>
    %c0_3 = arith.constant 0 : index
    %c0_4 = arith.constant 0 : index
    %3 = vector.load %arg3[%c0_3, %c0_4] : memref<1x128xf32, #tpu.memory_space<vmem>>, vector<1x128xf32>
    %4 = vector.broadcast %3 : vector<1x128xf32> to vector<16x128xf32>
    %5 = arith.addf %2, %4 : vector<16x128xf32>
    %cst_5 = arith.constant 0.000000e+00 : f32
    %6 = vector.broadcast %cst_5 : f32 to vector<16x128xf32>
    %7 = arith.maximumf %5, %6 : vector<16x128xf32>
    %8 = arith.truncf %7 : vector<16x128xf32> to vector<16x128xbf16>
    %c0_6 = arith.constant 0 : index
    %c0_7 = arith.constant 0 : index
    %9 = vector.load %arg4[%c0_6, %c0_7] : memref<128x128xbf16, #tpu.memory_space<vmem>>, vector<128x128xbf16>
    %cst_8 = arith.constant dense<0.000000e+00> : vector<16x128xf32>
    %10 = tpu.matmul %8, %9, %cst_8 {dimension_numbers = #tpu.dot_dimension_numbers<[1], [0], [0], [1], [0, 0, 1, 1], [], []>} : vector<16x128xbf16>, vector<128x128xbf16>, vector<16x128xf32> -> vector<16x128xf32>
    %c0_9 = arith.constant 0 : index
    %c0_10 = arith.constant 0 : index
    %11 = vector.load %arg5[%c0_9, %c0_10] : memref<1x128xf32, #tpu.memory_space<vmem>>, vector<1x128xf32>
    %12 = vector.broadcast %11 : vector<1x128xf32> to vector<16x128xf32>
    %13 = arith.addf %10, %12 : vector<16x128xf32>
    %cst_11 = arith.constant 0.000000e+00 : f32
    %14 = vector.broadcast %cst_11 : f32 to vector<16x128xf32>
    %15 = arith.maximumf %13, %14 : vector<16x128xf32>
    %16 = arith.truncf %15 : vector<16x128xf32> to vector<16x128xbf16>
    %c0_12 = arith.constant 0 : index
    %c0_13 = arith.constant 0 : index
    %17 = vector.load %arg6[%c0_12, %c0_13] : memref<128x128xbf16, #tpu.memory_space<vmem>>, vector<128x128xbf16>
    %cst_14 = arith.constant dense<0.000000e+00> : vector<16x128xf32>
    %18 = tpu.matmul %16, %17, %cst_14 {dimension_numbers = #tpu.dot_dimension_numbers<[1], [0], [0], [1], [0, 0, 1, 1], [], []>} : vector<16x128xbf16>, vector<128x128xbf16>, vector<16x128xf32> -> vector<16x128xf32>
    %c0_15 = arith.constant 0 : index
    %c0_16 = arith.constant 0 : index
    %19 = vector.load %arg7[%c0_15, %c0_16] : memref<1x128xf32, #tpu.memory_space<vmem>>, vector<1x128xf32>
    %20 = vector.broadcast %19 : vector<1x128xf32> to vector<16x128xf32>
    %21 = arith.addf %18, %20 : vector<16x128xf32>
    %cst_17 = arith.constant 0.000000e+00 : f32
    %22 = vector.broadcast %cst_17 : f32 to vector<16x128xf32>
    %23 = arith.maximumf %21, %22 : vector<16x128xf32>
    %24 = arith.truncf %23 : vector<16x128xf32> to vector<16x128xbf16>
    %c0_18 = arith.constant 0 : index
    %c0_19 = arith.constant 0 : index
    %25 = vector.load %arg8[%c0_18, %c0_19] : memref<128x128xbf16, #tpu.memory_space<vmem>>, vector<128x128xbf16>
    %cst_20 = arith.constant dense<0.000000e+00> : vector<16x128xf32>
    %26 = tpu.matmul %24, %25, %cst_20 {dimension_numbers = #tpu.dot_dimension_numbers<[1], [0], [0], [1], [0, 0, 1, 1], [], []>} : vector<16x128xbf16>, vector<128x128xbf16>, vector<16x128xf32> -> vector<16x128xf32>
    %c0_21 = arith.constant 0 : index
    %c0_22 = arith.constant 0 : index
    %27 = vector.load %arg9[%c0_21, %c0_22] : memref<1x128xf32, #tpu.memory_space<vmem>>, vector<1x128xf32>
    %28 = vector.broadcast %27 : vector<1x128xf32> to vector<16x128xf32>
    %29 = arith.addf %26, %28 : vector<16x128xf32>
    %c0_23 = arith.constant 0 : index
    %c0_24 = arith.constant 0 : index
    %30 = vector.load %arg10[%c0_23, %c0_24] : memref<16x128xf32, #tpu.memory_space<vmem>>, vector<16x128xf32>
    tpu.vector_store %arg10[%c0_23, %c0_24], %29 {strides = array<i32>} : memref<16x128xf32, #tpu.memory_space<vmem>>, vector<16x128xf32>,
    return
  }
  func.func @transform_0(%arg0: i32) -> (i32, i32) {
    %c0_i32 = arith.constant 0 : i32
    %c0_i32_0 = arith.constant 0 : i32
    return %arg0, %c0_i32 : i32, i32
  }
  func.func @transform_1(%arg0: i32) -> (i32, i32) {
    %c0_i32 = arith.constant 0 : i32
    %c0_i32_0 = arith.constant 0 : i32
    %c0_i32_1 = arith.constant 0 : i32
    return %c0_i32, %c0_i32_0 : i32, i32
  }
  func.func @transform_2(%arg0: i32) -> (i32, i32) {
    %c0_i32 = arith.constant 0 : i32
    %c0_i32_0 = arith.constant 0 : i32
    %c0_i32_1 = arith.constant 0 : i32
    return %c0_i32, %c0_i32_0 : i32, i32
  }
  func.func @transform_3(%arg0: i32) -> (i32, i32) {
    %c0_i32 = arith.constant 0 : i32
    %c0_i32_0 = arith.constant 0 : i32
    %c0_i32_1 = arith.constant 0 : i32
    return %c0_i32, %c0_i32_0 : i32, i32
  }
  func.func @transform_4(%arg0: i32) -> (i32, i32) {
    %c0_i32 = arith.constant 0 : i32
    %c0_i32_0 = arith.constant 0 : i32
    %c0_i32_1 = arith.constant 0 : i32
    return %c0_i32, %c0_i32_0 : i32, i32
  }
  func.func @transform_5(%arg0: i32) -> (i32, i32) {
    %c0_i32 = arith.constant 0 : i32
    %c0_i32_0 = arith.constant 0 : i32
    %c0_i32_1 = arith.constant 0 : i32
    return %c0_i32, %c0_i32_0 : i32, i32
  }
  func.func @transform_6(%arg0: i32) -> (i32, i32) {
    %c0_i32 = arith.constant 0 : i32
    %c0_i32_0 = arith.constant 0 : i32
    %c0_i32_1 = arith.constant 0 : i32
    return %c0_i32, %c0_i32_0 : i32, i32
  }
  func.func @transform_7(%arg0: i32) -> (i32, i32) {
    %c0_i32 = arith.constant 0 : i32
    %c0_i32_0 = arith.constant 0 : i32
    %c0_i32_1 = arith.constant 0 : i32
    return %c0_i32, %c0_i32_0 : i32, i32
  }
  func.func @transform_8(%arg0: i32) -> (i32, i32) {
    %c0_i32 = arith.constant 0 : i32
    %c0_i32_0 = arith.constant 0 : i32
    %c0_i32_1 = arith.constant 0 : i32
    return %c0_i32, %c0_i32_0 : i32, i32
  }
  func.func @transform_9(%arg0: i32) -> (i32, i32) {
    %c0_i32 = arith.constant 0 : i32
    %c0_i32_0 = arith.constant 0 : i32
    return %arg0, %c0_i32 : i32, i32
  }
}

</mosaic_0001>

<llo_original>
// kernel: _mlp_forward_impl.1
$region0: #{_mlp_forward_impl.1}
  #allocation0 [shape = 'u32[]', space=smem, size = 0x4, offset = 0x4, fixed_abs, tag = 'smem constant byte address 0x4 - core index']
  #allocation1 [shape = 'u32[144,128]{1,0:T(1,128)}', space=vmem, size = 0x12000, scoped, tag = 'internal scratch']
  %s0 = inlined_call_operand.vmem [shape: bf16[16,128], index: 0, kind: input, shape index: {}]
  %s1 = inlined_call_operand.hbm [shape: bf16[128,128], index: 1, kind: input, shape index: {}]
  %s2 = inlined_call_operand.vmem [shape: f32[1,128], index: 2, kind: input, shape index: {}]
  %s3 = inlined_call_operand.hbm [shape: bf16[128,128], index: 3, kind: input, shape index: {}]
  %s4 = inlined_call_operand.vmem [shape: f32[1,128], index: 4, kind: input, shape index: {}]
  %s5 = inlined_call_operand.hbm [shape: bf16[128,128], index: 5, kind: input, shape index: {}]
  %s6 = inlined_call_operand.vmem [shape: f32[1,128], index: 6, kind: input, shape index: {}]
  %s7 = inlined_call_operand.hbm [shape: bf16[128,128], index: 7, kind: input, shape index: {}]
  %s8 = inlined_call_operand.vmem [shape: f32[1,128], index: 8, kind: input, shape index: {}]
  %s9 = inlined_call_operand.vmem [shape: f32[16,128], index: 9, kind: output, shape index: {}]
  %s10 = sld [smem:[#allocation0]]
  $region62: #{_mlp_forward_impl.1} parent=0
    _
  %s12 = ssub.s32 1, %s10
  %s13 = scalar_select 0, %s12, %s10
  $region1: #{_mlp_forward_impl.1} parent=0
    #allocation2 [shape = 'u8[32768]{0}', space=vmem, size = 0x8000, scoped, tag = 'input window, operand 1, single buffered']
    #allocation3 [shape = 's32[1]{0}', space=sflag, size = 0x4, scoped, tag = 'scoped memory for _mlp_forward_impl.1']
    #allocation4 [shape = 'u8[32768]{0}', space=vmem, size = 0x8000, scoped, tag = 'input window, operand 3, single buffered']
    #allocation5 [shape = 's32[1]{0}', space=sflag, size = 0x4, scoped, tag = 'scoped memory for _mlp_forward_impl.1']
    #allocation6 [shape = 'u8[32768]{0}', space=vmem, size = 0x8000, scoped, tag = 'input window, operand 5, single buffered']
    #allocation7 [shape = 'u8[32768]{0}', space=vmem, size = 0x8000, scoped, tag = 'input window, operand 7, single buffered']
    #allocation8 [shape = 's32[1]{0}', space=sflag, size = 0x4, scoped, tag = 'scoped memory for _mlp_forward_impl.1']
    %14 = vsyncpa [#allocation3], 0
    %15 = vsyncpa [#allocation5], 0
    %16 = vsyncpa [#allocation8], 0
    // Predicated region
    $region2: #{_mlp_forward_impl.1} parent=1 // pred_check
      _
    $region3: #{_mlp_forward_impl.1} parent=1 // pred_check_branch
      %18 = sbr.rel (0) target = $region5
    $region4: #{_mlp_forward_impl.1} parent=1 // pred_region
      _
    $region5: #{_mlp_forward_impl.1} parent=1 // pred_fallthru
      _
    // Predicated region
    $region6: #{_mlp_forward_impl.1} parent=1 // pred_check
      _
    $region7: #{_mlp_forward_impl.1} parent=1 // pred_check_branch
      %20 = sbr.rel (0) target = $region9
    $region8: #{_mlp_forward_impl.1} parent=1 // pred_region
      %s22 = ssub.s32 1024, 1024
      %23 = vsyncadd [#allocation3], %s22
      %s24 = sshll.u32 [#allocation2], 4
      %s25 = int_to_ptr.vmem [resolvable:$true] %s24
      %30 = dma.hbm_to_vmem [thread:$0]  %s1, 1024, %s25, [#allocation3], 64, 64, 4
    $region9: #{_mlp_forward_impl.1} parent=1 // pred_fallthru
      _
    // Predicated region
    $region10: #{_mlp_forward_impl.1} parent=1 // pred_check
      _
    $region11: #{_mlp_forward_impl.1} parent=1 // pred_check_branch
      %32 = sbr.rel (0) target = $region13
    $region12: #{_mlp_forward_impl.1} parent=1 // pred_region
      _
    $region13: #{_mlp_forward_impl.1} parent=1 // pred_fallthru
      _
    // Predicated region
    $region14: #{_mlp_forward_impl.1} parent=1 // pred_check
      _
    $region15: #{_mlp_forward_impl.1} parent=1 // pred_check_branch
      %34 = sbr.rel (0) target = $region17
    $region16: #{_mlp_forward_impl.1} parent=1 // pred_region
      %s36 = ssub.s32 1024, 1024
      %37 = vsyncadd [#allocation5], %s36
      %s38 = sshll.u32 [#allocation4], 4
      %s39 = int_to_ptr.vmem [resolvable:$true] %s38
      %44 = dma.hbm_to_vmem [thread:$0]  %s3, 1024, %s39, [#allocation5], 64, 64, 4
    $region17: #{_mlp_forward_impl.1} parent=1 // pred_fallthru
      _
    // Predicated region
    $region18: #{_mlp_forward_impl.1} parent=1 // pred_check
      _
    $region19: #{_mlp_forward_impl.1} parent=1 // pred_check_branch
      %46 = sbr.rel (0) target = $region21
    $region20: #{_mlp_forward_impl.1} parent=1 // pred_region
      _
    $region21: #{_mlp_forward_impl.1} parent=1 // pred_fallthru
      _
    // Predicated region
    $region22: #{_mlp_forward_impl.1} parent=1 // pred_check
      _
    $region23: #{_mlp_forward_impl.1} parent=1 // pred_check_branch
      %48 = sbr.rel (0) target = $region25
    $region24: #{_mlp_forward_impl.1} parent=1 // pred_region
      %s50 = ssub.s32 1024, 1024
      %51 = vsyncadd [#allocation5], %s50
      %s52 = sshll.u32 [#allocation6], 4
      %s53 = int_to_ptr.vmem [resolvable:$true] %s52
      %58 = dma.hbm_to_vmem [thread:$0]  %s5, 1024, %s53, [#allocation5], 64, 64, 4
    $region25: #{_mlp_forward_impl.1} parent=1 // pred_fallthru
      _
    // Predicated region
    $region26: #{_mlp_forward_impl.1} parent=1 // pred_check
      _
    $region27: #{_mlp_forward_impl.1} parent=1 // pred_check_branch
      %60 = sbr.rel (0) target = $region29
    $region28: #{_mlp_forward_impl.1} parent=1 // pred_region
      _
    $region29: #{_mlp_forward_impl.1} parent=1 // pred_fallthru
      _
    // Predicated region
    $region30: #{_mlp_forward_impl.1} parent=1 // pred_check
      _
    $region31: #{_mlp_forward_impl.1} parent=1 // pred_check_branch
      %62 = sbr.rel (0) target = $region33
    $region32: #{_mlp_forward_impl.1} parent=1 // pred_region
      %s64 = ssub.s32 1024, 1024
      %65 = vsyncadd [#allocation8], %s64
      %s66 = sshll.u32 [#allocation7], 4
      %s67 = int_to_ptr.vmem [resolvable:$true] %s66
      %72 = dma.hbm_to_vmem [thread:$0]  %s7, 1024, %s67, [#allocation8], 64, 64, 4
    $region33: #{_mlp_forward_impl.1} parent=1 // pred_fallthru
      _
    // Predicated region
    $region34: #{_mlp_forward_impl.1} parent=1 // pred_check
      _
    $region35: #{_mlp_forward_impl.1} parent=1 // pred_check_branch
      %74 = sbr.rel (0) target = $region37
    $region36: #{_mlp_forward_impl.1} parent=1 // pred_region
      _
    $region37: #{_mlp_forward_impl.1} parent=1 // pred_fallthru
      _
    // Predicated region
    $region38: #{_mlp_forward_impl.1} parent=1 // pred_check
      _
    $region39: #{_mlp_forward_impl.1} parent=1 // pred_check_branch
      %76 = sbr.rel (0) target = $region41
    $region40: #{_mlp_forward_impl.1} parent=1 // pred_region
      %77 = dma.done [#allocation3], 1024
    $region41: #{_mlp_forward_impl.1} parent=1 // pred_fallthru
      _
    // Predicated region
    $region42: #{_mlp_forward_impl.1} parent=1 // pred_check
      _
    $region43: #{_mlp_forward_impl.1} parent=1 // pred_check_branch
      %79 = sbr.rel (0) target = $region45
    $region44: #{_mlp_forward_impl.1} parent=1 // pred_region
      %80 = dma.done [#allocation5], 1024
    $region45: #{_mlp_forward_impl.1} parent=1 // pred_fallthru
      _
    // Predicated region
    $region46: #{_mlp_forward_impl.1} parent=1 // pred_check
      _
    $region47: #{_mlp_forward_impl.1} parent=1 // pred_check_branch
      %82 = sbr.rel (0) target = $region49
    $region48: #{_mlp_forward_impl.1} parent=1 // pred_region
      %83 = dma.done [#allocation5], 1024
    $region49: #{_mlp_forward_impl.1} parent=1 // pred_fallthru
      _
    // Predicated region
    $region50: #{_mlp_forward_impl.1} parent=1 // pred_check
      _
    $region51: #{_mlp_forward_impl.1} parent=1 // pred_check_branch
      %85 = sbr.rel (0) target = $region53
    $region52: #{_mlp_forward_impl.1} parent=1 // pred_region
      %86 = dma.done [#allocation8], 1024
    $region53: #{_mlp_forward_impl.1} parent=1 // pred_fallthru
      _
    %v88 = vld [vmem:[%s0] sm:$0xf]
    %v89 = vld [vmem:[%s0 + $0x4] sm:$0xf]
    %v90 = vld [vmem:[#allocation2] sm:$0xf]
    %v91 = vld [vmem:[#allocation2 + $0x4] sm:$0xf]
    %v92 = vld [vmem:[#allocation2 + $0x8] sm:$0xf]
    %v93 = vld [vmem:[#allocation2 + $0xc] sm:$0xf]
    %v94 = vld [vmem:[#allocation2 + $0x10] sm:$0xf]
    %v95 = vld [vmem:[#allocation2 + $0x14] sm:$0xf]
    %v96 = vld [vmem:[#allocation2 + $0x18] sm:$0xf]
    %v97 = vld [vmem:[#allocation2 + $0x1c] sm:$0xf]
    %v98 = vld [vmem:[#allocation2 + $0x20] sm:$0xf]
    %v99 = vld [vmem:[#allocation2 + $0x24] sm:$0xf]
    %v100 = vld [vmem:[#allocation2 + $0x28] sm:$0xf]
    %v101 = vld [vmem:[#allocation2 + $0x2c] sm:$0xf]
    %v102 = vld [vmem:[#allocation2 + $0x30] sm:$0xf]
    %v103 = vld [vmem:[#allocation2 + $0x34] sm:$0xf]
    %v104 = vld [vmem:[#allocation2 + $0x38] sm:$0xf]
    %v105 = vld [vmem:[#allocation2 + $0x3c] sm:$0xf]
    %v106 = vld [vmem:[%s2] sm:$0x1]
    %v108 = vlaneseq
    %v109 = vshrl.u32 %v108, 7
    %v110 = vsub.s32 0, %v109
    %v111 = vrot.slane %v106, %v110
    %v115 = vunpack.c.l.b16 %v88
    %v116 = vunpack.c.l.b16 %v89
    %v117 = vpack.c.b16 %v116, %v115
    %v135 = vunpack.c.l.b16 %v90
    %v136 = vunpack.c.l.b16 %v91
    %v137 = vunpack.c.l.b16 %v92
    %v138 = vunpack.c.l.b16 %v93
    %v139 = vunpack.c.l.b16 %v94
    %v140 = vunpack.c.l.b16 %v95
    %v141 = vunpack.c.l.b16 %v96
    %v142 = vunpack.c.l.b16 %v97
    %v143 = vunpack.c.l.b16 %v98
    %v144 = vunpack.c.l.b16 %v99
    %v145 = vunpack.c.l.b16 %v100
    %v146 = vunpack.c.l.b16 %v101
    %v147 = vunpack.c.l.b16 %v102
    %v148 = vunpack.c.l.b16 %v103
    %v149 = vunpack.c.l.b16 %v104
    %v150 = vunpack.c.l.b16 %v105
    %v151 = vpack.c.b16 %v136, %v135
    %v152 = vpack.c.b16 %v138, %v137
    %v153 = vpack.c.b16 %v140, %v139
    %v154 = vpack.c.b16 %v142, %v141
    %v155 = vpack.c.b16 %v144, %v143
    %v156 = vpack.c.b16 %v146, %v145
    %v157 = vpack.c.b16 %v148, %v147
    %v158 = vpack.c.b16 %v150, %v149
    %167 = vmatprep.subr.bf16.mxu0 0
    %168 = vmatpush1.bf16.msra.mxu0 %v158
    %169 = vmatprep.subr.bf16.mxu0 0
    %170 = vmatpush1.bf16.msra.mxu0 %v157
    %171 = vmatprep.subr.bf16.mxu0 0
    %172 = vmatpush1.bf16.msra.mxu0 %v156
    %173 = vmatprep.subr.bf16.mxu0 0
    %174 = vmatpush1.bf16.msra.mxu0 %v155
    %175 = vmatprep.subr.bf16.mxu0 0
    %176 = vmatpush1.bf16.msra.mxu0 %v154
    %177 = vmatprep.subr.bf16.mxu0 0
    %178 = vmatpush1.bf16.msra.mxu0 %v153
    %179 = vmatprep.subr.bf16.mxu0 0
    %180 = vmatpush1.bf16.msra.mxu0 %v152
    %181 = vmatprep.subr.bf16.mxu0 0
    %182 = vmatpush1.bf16.msra.mxu0 %v151
    %183 = vmatprep.subr.bf16.mxu0 0
    %184 = vmatpush2.bf16.msra.mxu0 0
    %185 = vmatprep.subr.bf16.mxu0 0
    %186 = vmatpush2.bf16.msra.mxu0 0
    %187 = vmatprep.subr.bf16.mxu0 0
    %188 = vmatpush2.bf16.msra.mxu0 0
    %189 = vmatprep.subr.bf16.mxu0 0
    %190 = vmatpush2.bf16.msra.mxu0 0
    %191 = vmatprep.subr.bf16.mxu0 0
    %192 = vmatpush2.bf16.msra.mxu0 0
    %193 = vmatprep.subr.bf16.mxu0 0
    %194 = vmatpush2.bf16.msra.mxu0 0
    %195 = vmatprep.subr.bf16.mxu0 0
    %196 = vmatpush2.bf16.msra.mxu0 0
    %197 = vmatprep.subr.bf16.mxu0 0
    %198 = vmatpush2.bf16.msra.mxu0 0
    %199 = vmatprep.mubr.bf16.mxu0 0
    %200 = vmatmul.mubr.bf16.gmra.mxu0 %v117
    %v201 = vpop.f32.mrf.mxu0
    %v202 = vadd.f32 %v111, %v201
    %v203 = vpop.f32.mrf.mxu0
    %v204 = vpop.f32.mrf.mxu0
    %v205 = vadd.f32 %v111, %v204
    %v206 = vpop.f32.mrf.mxu0
    %207 = vdwg.mxu0
    %v208 = vmax.f32 %v202, 0.0
    %v209 = vmax.f32 %v205, 0.0
    %v210 = vpack.c.bf16 %v209, %v208
    %v211 = vld [vmem:[#allocation4] sm:$0xf]
    %v212 = vld [vmem:[#allocation4 + $0x4] sm:$0xf]
    %v213 = vld [vmem:[#allocation4 + $0x8] sm:$0xf]
    %v214 = vld [vmem:[#allocation4 + $0xc] sm:$0xf]
    %v215 = vld [vmem:[#allocation4 + $0x10] sm:$0xf]
    %v216 = vld [vmem:[#allocation4 + $0x14] sm:$0xf]
    %v217 = vld [vmem:[#allocation4 + $0x18] sm:$0xf]
    %v218 = vld [vmem:[#allocation4 + $0x1c] sm:$0xf]
    %v219 = vld [vmem:[#allocation4 + $0x20] sm:$0xf]
    %v220 = vld [vmem:[#allocation4 + $0x24] sm:$0xf]
    %v221 = vld [vmem:[#allocation4 + $0x28] sm:$0xf]
    %v222 = vld [vmem:[#allocation4 + $0x2c] sm:$0xf]
    %v223 = vld [vmem:[#allocation4 + $0x30] sm:$0xf]
    %v224 = vld [vmem:[#allocation4 + $0x34] sm:$0xf]
    %v225 = vld [vmem:[#allocation4 + $0x38] sm:$0xf]
    %v226 = vld [vmem:[#allocation4 + $0x3c] sm:$0xf]
    %v227 = vld [vmem:[%s4] sm:$0x1]
    %v229 = vlaneseq
    %v230 = vshrl.u32 %v229, 7
    %v231 = vsub.s32 0, %v230
    %v232 = vrot.slane %v227, %v231
    %v250 = vunpack.c.l.b16 %v211
    %v251 = vunpack.c.l.b16 %v212
    %v252 = vunpack.c.l.b16 %v213
    %v253 = vunpack.c.l.b16 %v214
    %v254 = vunpack.c.l.b16 %v215
    %v255 = vunpack.c.l.b16 %v216
    %v256 = vunpack.c.l.b16 %v217
    %v257 = vunpack.c.l.b16 %v218
    %v258 = vunpack.c.l.b16 %v219
    %v259 = vunpack.c.l.b16 %v220
    %v260 = vunpack.c.l.b16 %v221
    %v261 = vunpack.c.l.b16 %v222
    %v262 = vunpack.c.l.b16 %v223
    %v263 = vunpack.c.l.b16 %v224
    %v264 = vunpack.c.l.b16 %v225
    %v265 = vunpack.c.l.b16 %v226
    %v266 = vpack.c.b16 %v251, %v250
    %v267 = vpack.c.b16 %v253, %v252
    %v268 = vpack.c.b16 %v255, %v254
    %v269 = vpack.c.b16 %v257, %v256
    %v270 = vpack.c.b16 %v259, %v258
    %v271 = vpack.c.b16 %v261, %v260
    %v272 = vpack.c.b16 %v263, %v262
    %v273 = vpack.c.b16 %v265, %v264
    %282 = vmatprep.subr.bf16.mxu0 0
    %283 = vmatpush1.bf16.msra.mxu0 %v273
    %284 = vmatprep.subr.bf16.mxu0 0
    %285 = vmatpush1.bf16.msra.mxu0 %v272
    %286 = vmatprep.subr.bf16.mxu0 0
    %287 = vmatpush1.bf16.msra.mxu0 %v271
    %288 = vmatprep.subr.bf16.mxu0 0
    %289 = vmatpush1.bf16.msra.mxu0 %v270
    %290 = vmatprep.subr.bf16.mxu0 0
    %291 = vmatpush1.bf16.msra.mxu0 %v269
    %292 = vmatprep.subr.bf16.mxu0 0
    %293 = vmatpush1.bf16.msra.mxu0 %v268
    %294 = vmatprep.subr.bf16.mxu0 0
    %295 = vmatpush1.bf16.msra.mxu0 %v267
    %296 = vmatprep.subr.bf16.mxu0 0
    %297 = vmatpush1.bf16.msra.mxu0 %v266
    %298 = vmatprep.subr.bf16.mxu0 0
    %299 = vmatpush2.bf16.msra.mxu0 0
    %300 = vmatprep.subr.bf16.mxu0 0
    %301 = vmatpush2.bf16.msra.mxu0 0
    %302 = vmatprep.subr.bf16.mxu0 0
    %303 = vmatpush2.bf16.msra.mxu0 0
    %304 = vmatprep.subr.bf16.mxu0 0
    %305 = vmatpush2.bf16.msra.mxu0 0
    %306 = vmatprep.subr.bf16.mxu0 0
    %307 = vmatpush2.bf16.msra.mxu0 0
    %308 = vmatprep.subr.bf16.mxu0 0
    %309 = vmatpush2.bf16.msra.mxu0 0
    %310 = vmatprep.subr.bf16.mxu0 0
    %311 = vmatpush2.bf16.msra.mxu0 0
    %312 = vmatprep.subr.bf16.mxu0 0
    %313 = vmatpush2.bf16.msra.mxu0 0
    %314 = vmatprep.mubr.bf16.mxu0 0
    %315 = vmatmul.mubr.bf16.gmra.mxu0 %v210
    %v316 = vpop.f32.mrf.mxu0
    %v317 = vadd.f32 %v232, %v316
    %v318 = vpop.f32.mrf.mxu0
    %v319 = vpop.f32.mrf.mxu0
    %v320 = vadd.f32 %v232, %v319
    %v321 = vpop.f32.mrf.mxu0
    %322 = vdwg.mxu0
    %v323 = vmax.f32 %v317, 0.0
    %v324 = vmax.f32 %v320, 0.0
    %v325 = vpack.c.bf16 %v324, %v323
    %v326 = vld [vmem:[#allocation6] sm:$0xf]
    %v327 = vld [vmem:[#allocation6 + $0x4] sm:$0xf]
    %v328 = vld [vmem:[#allocation6 + $0x8] sm:$0xf]
    %v329 = vld [vmem:[#allocation6 + $0xc] sm:$0xf]
    %v330 = vld [vmem:[#allocation6 + $0x10] sm:$0xf]
    %v331 = vld [vmem:[#allocation6 + $0x14] sm:$0xf]
    %v332 = vld [vmem:[#allocation6 + $0x18] sm:$0xf]
    %v333 = vld [vmem:[#allocation6 + $0x1c] sm:$0xf]
    %v334 = vld [vmem:[#allocation6 + $0x20] sm:$0xf]
    %v335 = vld [vmem:[#allocation6 + $0x24] sm:$0xf]
    %v336 = vld [vmem:[#allocation6 + $0x28] sm:$0xf]
    %v337 = vld [vmem:[#allocation6 + $0x2c] sm:$0xf]
    %v338 = vld [vmem:[#allocation6 + $0x30] sm:$0xf]
    %v339 = vld [vmem:[#allocation6 + $0x34] sm:$0xf]
    %v340 = vld [vmem:[#allocation6 + $0x38] sm:$0xf]
    %v341 = vld [vmem:[#allocation6 + $0x3c] sm:$0xf]
    %v342 = vld [vmem:[%s6] sm:$0x1]
    %v344 = vlaneseq
    %v345 = vshrl.u32 %v344, 7
    %v346 = vsub.s32 0, %v345
    %v347 = vrot.slane %v342, %v346
    %v365 = vunpack.c.l.b16 %v326
    %v366 = vunpack.c.l.b16 %v327
    %v367 = vunpack.c.l.b16 %v328
    %v368 = vunpack.c.l.b16 %v329
    %v369 = vunpack.c.l.b16 %v330
    %v370 = vunpack.c.l.b16 %v331
    %v371 = vunpack.c.l.b16 %v332
    %v372 = vunpack.c.l.b16 %v333
    %v373 = vunpack.c.l.b16 %v334
    %v374 = vunpack.c.l.b16 %v335
    %v375 = vunpack.c.l.b16 %v336
    %v376 = vunpack.c.l.b16 %v337
    %v377 = vunpack.c.l.b16 %v338
    %v378 = vunpack.c.l.b16 %v339
    %v379 = vunpack.c.l.b16 %v340
    %v380 = vunpack.c.l.b16 %v341
    %v381 = vpack.c.b16 %v366, %v365
    %v382 = vpack.c.b16 %v368, %v367
    %v383 = vpack.c.b16 %v370, %v369
    %v384 = vpack.c.b16 %v372, %v371
    %v385 = vpack.c.b16 %v374, %v373
    %v386 = vpack.c.b16 %v376, %v375
    %v387 = vpack.c.b16 %v378, %v377
    %v388 = vpack.c.b16 %v380, %v379
    %397 = vmatprep.subr.bf16.mxu0 0
    %398 = vmatpush1.bf16.msra.mxu0 %v388
    %399 = vmatprep.subr.bf16.mxu0 0
    %400 = vmatpush1.bf16.msra.mxu0 %v387
    %401 = vmatprep.subr.bf16.mxu0 0
    %402 = vmatpush1.bf16.msra.mxu0 %v386
    %403 = vmatprep.subr.bf16.mxu0 0
    %404 = vmatpush1.bf16.msra.mxu0 %v385
    %405 = vmatprep.subr.bf16.mxu0 0
    %406 = vmatpush1.bf16.msra.mxu0 %v384
    %407 = vmatprep.subr.bf16.mxu0 0
    %408 = vmatpush1.bf16.msra.mxu0 %v383
    %409 = vmatprep.subr.bf16.mxu0 0
    %410 = vmatpush1.bf16.msra.mxu0 %v382
    %411 = vmatprep.subr.bf16.mxu0 0
    %412 = vmatpush1.bf16.msra.mxu0 %v381
    %413 = vmatprep.subr.bf16.mxu0 0
    %414 = vmatpush2.bf16.msra.mxu0 0
    %415 = vmatprep.subr.bf16.mxu0 0
    %416 = vmatpush2.bf16.msra.mxu0 0
    %417 = vmatprep.subr.bf16.mxu0 0
    %418 = vmatpush2.bf16.msra.mxu0 0
    %419 = vmatprep.subr.bf16.mxu0 0
    %420 = vmatpush2.bf16.msra.mxu0 0
    %421 = vmatprep.subr.bf16.mxu0 0
    %422 = vmatpush2.bf16.msra.mxu0 0
    %423 = vmatprep.subr.bf16.mxu0 0
    %424 = vmatpush2.bf16.msra.mxu0 0
    %425 = vmatprep.subr.bf16.mxu0 0
    %426 = vmatpush2.bf16.msra.mxu0 0
    %427 = vmatprep.subr.bf16.mxu0 0
    %428 = vmatpush2.bf16.msra.mxu0 0
    %429 = vmatprep.mubr.bf16.mxu0 0
    %430 = vmatmul.mubr.bf16.gmra.mxu0 %v325
    %v431 = vpop.f32.mrf.mxu0
    %v432 = vadd.f32 %v347, %v431
    %v433 = vpop.f32.mrf.mxu0
    %v434 = vpop.f32.mrf.mxu0
    %v435 = vadd.f32 %v347, %v434
    %v436 = vpop.f32.mrf.mxu0
    %437 = vdwg.mxu0
    %v438 = vmax.f32 %v432, 0.0
    %v439 = vmax.f32 %v435, 0.0
    %v440 = vpack.c.bf16 %v439, %v438
    %v441 = vld [vmem:[#allocation7] sm:$0xf]
    %v442 = vld [vmem:[#allocation7 + $0x4] sm:$0xf]
    %v443 = vld [vmem:[#allocation7 + $0x8] sm:$0xf]
    %v444 = vld [vmem:[#allocation7 + $0xc] sm:$0xf]
    %v445 = vld [vmem:[#allocation7 + $0x10] sm:$0xf]
    %v446 = vld [vmem:[#allocation7 + $0x14] sm:$0xf]
    %v447 = vld [vmem:[#allocation7 + $0x18] sm:$0xf]
    %v448 = vld [vmem:[#allocation7 + $0x1c] sm:$0xf]
    %v449 = vld [vmem:[#allocation7 + $0x20] sm:$0xf]
    %v450 = vld [vmem:[#allocation7 + $0x24] sm:$0xf]
    %v451 = vld [vmem:[#allocation7 + $0x28] sm:$0xf]
    %v452 = vld [vmem:[#allocation7 + $0x2c] sm:$0xf]
    %v453 = vld [vmem:[#allocation7 + $0x30] sm:$0xf]
    %v454 = vld [vmem:[#allocation7 + $0x34] sm:$0xf]
    %v455 = vld [vmem:[#allocation7 + $0x38] sm:$0xf]
    %v456 = vld [vmem:[#allocation7 + $0x3c] sm:$0xf]
    %v457 = vld [vmem:[%s8] sm:$0x1]
    %v459 = vlaneseq
    %v460 = vshrl.u32 %v459, 7
    %v461 = vsub.s32 0, %v460
    %v462 = vrot.slane %v457, %v461
    %v480 = vunpack.c.l.b16 %v441
    %v481 = vunpack.c.l.b16 %v442
    %v482 = vunpack.c.l.b16 %v443
    %v483 = vunpack.c.l.b16 %v444
    %v484 = vunpack.c.l.b16 %v445
    %v485 = vunpack.c.l.b16 %v446
    %v486 = vunpack.c.l.b16 %v447
    %v487 = vunpack.c.l.b16 %v448
    %v488 = vunpack.c.l.b16 %v449
    %v489 = vunpack.c.l.b16 %v450
    %v490 = vunpack.c.l.b16 %v451
    %v491 = vunpack.c.l.b16 %v452
    %v492 = vunpack.c.l.b16 %v453
    %v493 = vunpack.c.l.b16 %v454
    %v494 = vunpack.c.l.b16 %v455
    %v495 = vunpack.c.l.b16 %v456
    %v496 = vpack.c.b16 %v481, %v480
    %v497 = vpack.c.b16 %v483, %v482
    %v498 = vpack.c.b16 %v485, %v484
    %v499 = vpack.c.b16 %v487, %v486
    %v500 = vpack.c.b16 %v489, %v488
    %v501 = vpack.c.b16 %v491, %v490
    %v502 = vpack.c.b16 %v493, %v492
    %v503 = vpack.c.b16 %v495, %v494
    %512 = vmatprep.subr.bf16.mxu0 0
    %513 = vmatpush1.bf16.msra.mxu0 %v503
    %514 = vmatprep.subr.bf16.mxu0 0
    %515 = vmatpush1.bf16.msra.mxu0 %v502
    %516 = vmatprep.subr.bf16.mxu0 0
    %517 = vmatpush1.bf16.msra.mxu0 %v501
    %518 = vmatprep.subr.bf16.mxu0 0
    %519 = vmatpush1.bf16.msra.mxu0 %v500
    %520 = vmatprep.subr.bf16.mxu0 0
    %521 = vmatpush1.bf16.msra.mxu0 %v499
    %522 = vmatprep.subr.bf16.mxu0 0
    %523 = vmatpush1.bf16.msra.mxu0 %v498
    %524 = vmatprep.subr.bf16.mxu0 0
    %525 = vmatpush1.bf16.msra.mxu0 %v497
    %526 = vmatprep.subr.bf16.mxu0 0
    %527 = vmatpush1.bf16.msra.mxu0 %v496
    %528 = vmatprep.subr.bf16.mxu0 0
    %529 = vmatpush2.bf16.msra.mxu0 0
    %530 = vmatprep.subr.bf16.mxu0 0
    %531 = vmatpush2.bf16.msra.mxu0 0
    %532 = vmatprep.subr.bf16.mxu0 0
    %533 = vmatpush2.bf16.msra.mxu0 0
    %534 = vmatprep.subr.bf16.mxu0 0
    %535 = vmatpush2.bf16.msra.mxu0 0
    %536 = vmatprep.subr.bf16.mxu0 0
    %537 = vmatpush2.bf16.msra.mxu0 0
    %538 = vmatprep.subr.bf16.mxu0 0
    %539 = vmatpush2.bf16.msra.mxu0 0
    %540 = vmatprep.subr.bf16.mxu0 0
    %541 = vmatpush2.bf16.msra.mxu0 0
    %542 = vmatprep.subr.bf16.mxu0 0
    %543 = vmatpush2.bf16.msra.mxu0 0
    %544 = vmatprep.mubr.bf16.mxu0 0
    %545 = vmatmul.mubr.bf16.gmra.mxu0 %v440
    %v546 = vpop.f32.mrf.mxu0
    %v547 = vadd.f32 %v462, %v546
    %v548 = vpop.f32.mrf.mxu0
    %v549 = vpop.f32.mrf.mxu0
    %v550 = vadd.f32 %v462, %v549
    %v551 = vpop.f32.mrf.mxu0
    %552 = vdwg.mxu0
    %553 = vst [vmem:[%s9] sm:$0xff] %v547
    %554 = vst [vmem:[%s9 + $0x8] sm:$0xff] %v550
    // Predicated region
    $region54: #{_mlp_forward_impl.1} parent=1 // pred_check
      _
    $region55: #{_mlp_forward_impl.1} parent=1 // pred_check_branch
      %556 = sbr.rel (0) target = $region57
    $region56: #{_mlp_forward_impl.1} parent=1 // pred_region
      _
    $region57: #{_mlp_forward_impl.1} parent=1 // pred_fallthru
      _
    // Predicated region
    $region58: #{_mlp_forward_impl.1} parent=1 // pred_check
      _
    $region59: #{_mlp_forward_impl.1} parent=1 // pred_check_branch
      %558 = sbr.rel (0) target = $region61
    $region60: #{_mlp_forward_impl.1} parent=1 // pred_region
      _
    $region61: #{_mlp_forward_impl.1} parent=1 // pred_fallthru
      _
    %559 = vsyncpa [#allocation3], 1
    %560 = vsyncpa [#allocation5], 1
    %561 = vsyncpa [#allocation8], 1

// kernel: _mlp_forward_impl.1
$region0: #{_mlp_forward_impl.1}
  #allocation0 [shape = 'u32[]', space=smem, size = 0x4, offset = 0x4, fixed_abs, tag = 'smem constant byte address 0x4 - core index']
  #allocation1 [shape = 'u32[144,128]{1,0:T(1,128)}', space=vmem, size = 0x12000, scoped, tag = 'internal scratch']
  %s0 = inlined_call_operand.vmem [shape: bf16[16,128], index: 0, kind: input, shape index: {}]
  %s1 = inlined_call_operand.hbm [shape: bf16[128,128], index: 1, kind: input, shape index: {}]
  %s2 = inlined_call_operand.vmem [shape: f32[1,128], index: 2, kind: input, shape index: {}]
  %s3 = inlined_call_operand.hbm [shape: bf16[128,128], index: 3, kind: input, shape index: {}]
  %s4 = inlined_call_operand.vmem [shape: f32[1,128], index: 4, kind: input, shape index: {}]
  %s5 = inlined_call_operand.hbm [shape: bf16[128,128], index: 5, kind: input, shape index: {}]
  %s6 = inlined_call_operand.vmem [shape: f32[1,128], index: 6, kind: input, shape index: {}]
  %s7 = inlined_call_operand.hbm [shape: bf16[128,128], index: 7, kind: input, shape index: {}]
  %s8 = inlined_call_operand.vmem [shape: f32[1,128], index: 8, kind: input, shape index: {}]
  %s9 = inlined_call_operand.vmem [shape: f32[16,128], index: 9, kind: output, shape index: {}]
  %s10 = sld [smem:[#allocation0]]
  $region62: #{_mlp_forward_impl.1} parent=0
    _
  %s12 = ssub.s32 1, %s10
  %s13 = scalar_select 0, %s12, %s10
  $region1: #{_mlp_forward_impl.1} parent=0
    #allocation2 [shape = 'u8[32768]{0}', space=vmem, size = 0x8000, scoped, tag = 'input window, operand 1, single buffered']
    #allocation3 [shape = 's32[1]{0}', space=sflag, size = 0x4, scoped, tag = 'scoped memory for _mlp_forward_impl.1']
    #allocation4 [shape = 'u8[32768]{0}', space=vmem, size = 0x8000, scoped, tag = 'input window, operand 3, single buffered']
    #allocation5 [shape = 's32[1]{0}', space=sflag, size = 0x4, scoped, tag = 'scoped memory for _mlp_forward_impl.1']
    #allocation6 [shape = 'u8[32768]{0}', space=vmem, size = 0x8000, scoped, tag = 'input window, operand 5, single buffered']
    #allocation7 [shape = 'u8[32768]{0}', space=vmem, size = 0x8000, scoped, tag = 'input window, operand 7, single buffered']
    #allocation8 [shape = 's32[1]{0}', space=sflag, size = 0x4, scoped, tag = 'scoped memory for _mlp_forward_impl.1']
    %14 = vsyncpa [#allocation3], 0
    %15 = vsyncpa [#allocation5], 0
    %16 = vsyncpa [#allocation8], 0
    // Predicated region
    $region2: #{_mlp_forward_impl.1} parent=1 // pred_check
      _
    $region3: #{_mlp_forward_impl.1} parent=1 // pred_check_branch
      %18 = sbr.rel (0) target = $region5
    $region4: #{_mlp_forward_impl.1} parent=1 // pred_region
      _
    $region5: #{_mlp_forward_impl.1} parent=1 // pred_fallthru
      _
    // Predicated region
    $region6: #{_mlp_forward_impl.1} parent=1 // pred_check
      _
    $region7: #{_mlp_forward_impl.1} parent=1 // pred_check_branch
      %20 = sbr.rel (0) target = $region9
    $region8: #{_mlp_forward_impl.1} parent=1 // pred_region
      %s22 = ssub.s32 1024, 1024
      %23 = vsyncadd [#allocation3], %s22
      %s24 = sshll.u32 [#allocation2], 4
      %s25 = int_to_ptr.vmem [resolvable:$true] %s24
      %30 = dma.hbm_to_vmem [thread:$0]  %s1, 1024, %s25, [#allocation3], 64, 64, 4
    $region9: #{_mlp_forward_impl.1} parent=1 // pred_fallthru
      _
    // Predicated region
    $region10: #{_mlp_forward_impl.1} parent=1 // pred_check
      _
    $region11: #{_mlp_forward_impl.1} parent=1 // pred_check_branch
      %32 = sbr.rel (0) target = $region13
    $region12: #{_mlp_forward_impl.1} parent=1 // pred_region
      _
    $region13: #{_mlp_forward_impl.1} parent=1 // pred_fallthru
      _
    // Predicated region
    $region14: #{_mlp_forward_impl.1} parent=1 // pred_check
      _
    $region15: #{_mlp_forward_impl.1} parent=1 // pred_check_branch
      %34 = sbr.rel (0) target = $region17
    $region16: #{_mlp_forward_impl.1} parent=1 // pred_region
      %s36 = ssub.s32 1024, 1024
      %37 = vsyncadd [#allocation5], %s36
      %s38 = sshll.u32 [#allocation4], 4
      %s39 = int_to_ptr.vmem [resolvable:$true] %s38
      %44 = dma.hbm_to_vmem [thread:$0]  %s3, 1024, %s39, [#allocation5], 64, 64, 4
    $region17: #{_mlp_forward_impl.1} parent=1 // pred_fallthru
      _
    // Predicated region
    $region18: #{_mlp_forward_impl.1} parent=1 // pred_check
      _
    $region19: #{_mlp_forward_impl.1} parent=1 // pred_check_branch
      %46 = sbr.rel (0) target = $region21
    $region20: #{_mlp_forward_impl.1} parent=1 // pred_region
      _
    $region21: #{_mlp_forward_impl.1} parent=1 // pred_fallthru
      _
    // Predicated region
    $region22: #{_mlp_forward_impl.1} parent=1 // pred_check
      _
    $region23: #{_mlp_forward_impl.1} parent=1 // pred_check_branch
      %48 = sbr.rel (0) target = $region25
    $region24: #{_mlp_forward_impl.1} parent=1 // pred_region
      %s50 = ssub.s32 1024, 1024
      %51 = vsyncadd [#allocation5], %s50
      %s52 = sshll.u32 [#allocation6], 4
      %s53 = int_to_ptr.vmem [resolvable:$true] %s52
      %58 = dma.hbm_to_vmem [thread:$0]  %s5, 1024, %s53, [#allocation5], 64, 64, 4
    $region25: #{_mlp_forward_impl.1} parent=1 // pred_fallthru
      _
    // Predicated region
    $region26: #{_mlp_forward_impl.1} parent=1 // pred_check
      _
    $region27: #{_mlp_forward_impl.1} parent=1 // pred_check_branch
      %60 = sbr.rel (0) target = $region29
    $region28: #{_mlp_forward_impl.1} parent=1 // pred_region
      _
    $region29: #{_mlp_forward_impl.1} parent=1 // pred_fallthru
      _
    // Predicated region
    $region30: #{_mlp_forward_impl.1} parent=1 // pred_check
      _
    $region31: #{_mlp_forward_impl.1} parent=1 // pred_check_branch
      %62 = sbr.rel (0) target = $region33
    $region32: #{_mlp_forward_impl.1} parent=1 // pred_region
      %s64 = ssub.s32 1024, 1024
      %65 = vsyncadd [#allocation8], %s64
      %s66 = sshll.u32 [#allocation7], 4
      %s67 = int_to_ptr.vmem [resolvable:$true] %s66
      %72 = dma.hbm_to_vmem [thread:$0]  %s7, 1024, %s67, [#allocation8], 64, 64, 4
    $region33: #{_mlp_forward_impl.1} parent=1 // pred_fallthru
      _
    // Predicated region
    $region34: #{_mlp_forward_impl.1} parent=1 // pred_check
      _
    $region35: #{_mlp_forward_impl.1} parent=1 // pred_check_branch
      %74 = sbr.rel (0) target = $region37
    $region36: #{_mlp_forward_impl.1} parent=1 // pred_region
      _
    $region37: #{_mlp_forward_impl.1} parent=1 // pred_fallthru
      _
    // Predicated region
    $region38: #{_mlp_forward_impl.1} parent=1 // pred_check
      _
    $region39: #{_mlp_forward_impl.1} parent=1 // pred_check_branch
      %76 = sbr.rel (0) target = $region41
    $region40: #{_mlp_forward_impl.1} parent=1 // pred_region
      %77 = dma.done [#allocation3], 1024
    $region41: #{_mlp_forward_impl.1} parent=1 // pred_fallthru
      _
    // Predicated region
    $region42: #{_mlp_forward_impl.1} parent=1 // pred_check
      _
    $region43: #{_mlp_forward_impl.1} parent=1 // pred_check_branch
      %79 = sbr.rel (0) target = $region45
    $region44: #{_mlp_forward_impl.1} parent=1 // pred_region
      %80 = dma.done [#allocation5], 1024
    $region45: #{_mlp_forward_impl.1} parent=1 // pred_fallthru
      _
    // Predicated region
    $region46: #{_mlp_forward_impl.1} parent=1 // pred_check
      _
    $region47: #{_mlp_forward_impl.1} parent=1 // pred_check_branch
      %82 = sbr.rel (0) target = $region49
    $region48: #{_mlp_forward_impl.1} parent=1 // pred_region
      %83 = dma.done [#allocation5], 1024
    $region49: #{_mlp_forward_impl.1} parent=1 // pred_fallthru
      _
    // Predicated region
    $region50: #{_mlp_forward_impl.1} parent=1 // pred_check
      _
    $region51: #{_mlp_forward_impl.1} parent=1 // pred_check_branch
      %85 = sbr.rel (0) target = $region53
    $region52: #{_mlp_forward_impl.1} parent=1 // pred_region
      %86 = dma.done [#allocation8], 1024
    $region53: #{_mlp_forward_impl.1} parent=1 // pred_fallthru
      _
    %v88 = vld [vmem:[%s0] sm:$0xf]
    %v89 = vld [vmem:[%s0 + $0x4] sm:$0xf]
    %v90 = vld [vmem:[#allocation2] sm:$0xf]
    %v91 = vld [vmem:[#allocation2 + $0x4] sm:$0xf]
    %v92 = vld [vmem:[#allocation2 + $0x8] sm:$0xf]
    %v93 = vld [vmem:[#allocation2 + $0xc] sm:$0xf]
    %v94 = vld [vmem:[#allocation2 + $0x10] sm:$0xf]
    %v95 = vld [vmem:[#allocation2 + $0x14] sm:$0xf]
    %v96 = vld [vmem:[#allocation2 + $0x18] sm:$0xf]
    %v97 = vld [vmem:[#allocation2 + $0x1c] sm:$0xf]
    %v98 = vld [vmem:[#allocation2 + $0x20] sm:$0xf]
    %v99 = vld [vmem:[#allocation2 + $0x24] sm:$0xf]
    %v100 = vld [vmem:[#allocation2 + $0x28] sm:$0xf]
    %v101 = vld [vmem:[#allocation2 + $0x2c] sm:$0xf]
    %v102 = vld [vmem:[#allocation2 + $0x30] sm:$0xf]
    %v103 = vld [vmem:[#allocation2 + $0x34] sm:$0xf]
    %v104 = vld [vmem:[#allocation2 + $0x38] sm:$0xf]
    %v105 = vld [vmem:[#allocation2 + $0x3c] sm:$0xf]
    %v106 = vld [vmem:[%s2] sm:$0x1]
    %v108 = vlaneseq
    %v109 = vshrl.u32 %v108, 7
    %v110 = vsub.s32 0, %v109
    %v111 = vrot.slane %v106, %v110
    %v115 = vunpack.c.l.b16 %v88
    %v116 = vunpack.c.l.b16 %v89
    %v117 = vpack.c.b16 %v116, %v115
    %v135 = vunpack.c.l.b16 %v90
    %v136 = vunpack.c.l.b16 %v91
    %v137 = vunpack.c.l.b16 %v92
    %v138 = vunpack.c.l.b16 %v93
    %v139 = vunpack.c.l.b16 %v94
    %v140 = vunpack.c.l.b16 %v95
    %v141 = vunpack.c.l.b16 %v96
    %v142 = vunpack.c.l.b16 %v97
    %v143 = vunpack.c.l.b16 %v98
    %v144 = vunpack.c.l.b16 %v99
    %v145 = vunpack.c.l.b16 %v100
    %v146 = vunpack.c.l.b16 %v101
    %v147 = vunpack.c.l.b16 %v102
    %v148 = vunpack.c.l.b16 %v103
    %v149 = vunpack.c.l.b16 %v104
    %v150 = vunpack.c.l.b16 %v105
    %v151 = vpack.c.b16 %v136, %v135
    %v152 = vpack.c.b16 %v138, %v137
    %v153 = vpack.c.b16 %v140, %v139
    %v154 = vpack.c.b16 %v142, %v141
    %v155 = vpack.c.b16 %v144, %v143
    %v156 = vpack.c.b16 %v146, %v145
    %v157 = vpack.c.b16 %v148, %v147
    %v158 = vpack.c.b16 %v150, %v149
    %167 = vmatprep.subr.bf16.mxu0 0
    %168 = vmatpush1.bf16.msra.mxu0 %v158
    %169 = vmatprep.subr.bf16.mxu0 0
    %170 = vmatpush1.bf16.msra.mxu0 %v157
    %171 = vmatprep.subr.bf16.mxu0 0
    %172 = vmatpush1.bf16.msra.mxu0 %v156
    %173 = vmatprep.subr.bf16.mxu0 0
    %174 = vmatpush1.bf16.msra.mxu0 %v155
    %175 = vmatprep.subr.bf16.mxu0 0
    %176 = vmatpush1.bf16.msra.mxu0 %v154
    %177 = vmatprep.subr.bf16.mxu0 0
    %178 = vmatpush1.bf16.msra.mxu0 %v153
    %179 = vmatprep.subr.bf16.mxu0 0
    %180 = vmatpush1.bf16.msra.mxu0 %v152
    %181 = vmatprep.subr.bf16.mxu0 0
    %182 = vmatpush1.bf16.msra.mxu0 %v151
    %183 = vmatprep.subr.bf16.mxu0 0
    %184 = vmatpush2.bf16.msra.mxu0 0
    %185 = vmatprep.subr.bf16.mxu0 0
    %186 = vmatpush2.bf16.msra.mxu0 0
    %187 = vmatprep.subr.bf16.mxu0 0
    %188 = vmatpush2.bf16.msra.mxu0 0
    %189 = vmatprep.subr.bf16.mxu0 0
    %190 = vmatpush2.bf16.msra.mxu0 0
    %191 = vmatprep.subr.bf16.mxu0 0
    %192 = vmatpush2.bf16.msra.mxu0 0
    %193 = vmatprep.subr.bf16.mxu0 0
    %194 = vmatpush2.bf16.msra.mxu0 0
    %195 = vmatprep.subr.bf16.mxu0 0
    %196 = vmatpush2.bf16.msra.mxu0 0
    %197 = vmatprep.subr.bf16.mxu0 0
    %198 = vmatpush2.bf16.msra.mxu0 0
    %199 = vmatprep.mubr.bf16.mxu0 0
    %200 = vmatmul.mubr.bf16.gmra.mxu0 %v117
    %v201 = vpop.f32.mrf.mxu0
    %v202 = vadd.f32 %v111, %v201
    %v203 = vpop.f32.mrf.mxu0
    %v204 = vpop.f32.mrf.mxu0
    %v205 = vadd.f32 %v111, %v204
    %v206 = vpop.f32.mrf.mxu0
    %207 = vdwg.mxu0
    %v208 = vmax.f32 %v202, 0.0
    %v209 = vmax.f32 %v205, 0.0
    %v210 = vpack.c.bf16 %v209, %v208
    %v211 = vld [vmem:[#allocation4] sm:$0xf]
    %v212 = vld [vmem:[#allocation4 + $0x4] sm:$0xf]
    %v213 = vld [vmem:[#allocation4 + $0x8] sm:$0xf]
    %v214 = vld [vmem:[#allocation4 + $0xc] sm:$0xf]
    %v215 = vld [vmem:[#allocation4 + $0x10] sm:$0xf]
    %v216 = vld [vmem:[#allocation4 + $0x14] sm:$0xf]
    %v217 = vld [vmem:[#allocation4 + $0x18] sm:$0xf]
    %v218 = vld [vmem:[#allocation4 + $0x1c] sm:$0xf]
    %v219 = vld [vmem:[#allocation4 + $0x20] sm:$0xf]
    %v220 = vld [vmem:[#allocation4 + $0x24] sm:$0xf]
    %v221 = vld [vmem:[#allocation4 + $0x28] sm:$0xf]
    %v222 = vld [vmem:[#allocation4 + $0x2c] sm:$0xf]
    %v223 = vld [vmem:[#allocation4 + $0x30] sm:$0xf]
    %v224 = vld [vmem:[#allocation4 + $0x34] sm:$0xf]
    %v225 = vld [vmem:[#allocation4 + $0x38] sm:$0xf]
    %v226 = vld [vmem:[#allocation4 + $0x3c] sm:$0xf]
    %v227 = vld [vmem:[%s4] sm:$0x1]
    %v229 = vlaneseq
    %v230 = vshrl.u32 %v229, 7
    %v231 = vsub.s32 0, %v230
    %v232 = vrot.slane %v227, %v231
    %v250 = vunpack.c.l.b16 %v211
    %v251 = vunpack.c.l.b16 %v212
    %v252 = vunpack.c.l.b16 %v213
    %v253 = vunpack.c.l.b16 %v214
    %v254 = vunpack.c.l.b16 %v215
    %v255 = vunpack.c.l.b16 %v216
    %v256 = vunpack.c.l.b16 %v217
    %v257 = vunpack.c.l.b16 %v218
    %v258 = vunpack.c.l.b16 %v219
    %v259 = vunpack.c.l.b16 %v220
    %v260 = vunpack.c.l.b16 %v221
    %v261 = vunpack.c.l.b16 %v222
    %v262 = vunpack.c.l.b16 %v223
    %v263 = vunpack.c.l.b16 %v224
    %v264 = vunpack.c.l.b16 %v225
    %v265 = vunpack.c.l.b16 %v226
    %v266 = vpack.c.b16 %v251, %v250
    %v267 = vpack.c.b16 %v253, %v252
    %v268 = vpack.c.b16 %v255, %v254
    %v269 = vpack.c.b16 %v257, %v256
    %v270 = vpack.c.b16 %v259, %v258
    %v271 = vpack.c.b16 %v261, %v260
    %v272 = vpack.c.b16 %v263, %v262
    %v273 = vpack.c.b16 %v265, %v264
    %282 = vmatprep.subr.bf16.mxu0 0
    %283 = vmatpush1.bf16.msra.mxu0 %v273
    %284 = vmatprep.subr.bf16.mxu0 0
    %285 = vmatpush1.bf16.msra.mxu0 %v272
    %286 = vmatprep.subr.bf16.mxu0 0
    %287 = vmatpush1.bf16.msra.mxu0 %v271
    %288 = vmatprep.subr.bf16.mxu0 0
    %289 = vmatpush1.bf16.msra.mxu0 %v270
    %290 = vmatprep.subr.bf16.mxu0 0
    %291 = vmatpush1.bf16.msra.mxu0 %v269
    %292 = vmatprep.subr.bf16.mxu0 0
    %293 = vmatpush1.bf16.msra.mxu0 %v268
    %294 = vmatprep.subr.bf16.mxu0 0
    %295 = vmatpush1.bf16.msra.mxu0 %v267
    %296 = vmatprep.subr.bf16.mxu0 0
    %297 = vmatpush1.bf16.msra.mxu0 %v266
    %298 = vmatprep.subr.bf16.mxu0 0
    %299 = vmatpush2.bf16.msra.mxu0 0
    %300 = vmatprep.subr.bf16.mxu0 0
    %301 = vmatpush2.bf16.msra.mxu0 0
    %302 = vmatprep.subr.bf16.mxu0 0
    %303 = vmatpush2.bf16.msra.mxu0 0
    %304 = vmatprep.subr.bf16.mxu0 0
    %305 = vmatpush2.bf16.msra.mxu0 0
    %306 = vmatprep.subr.bf16.mxu0 0
    %307 = vmatpush2.bf16.msra.mxu0 0
    %308 = vmatprep.subr.bf16.mxu0 0
    %309 = vmatpush2.bf16.msra.mxu0 0
    %310 = vmatprep.subr.bf16.mxu0 0
    %311 = vmatpush2.bf16.msra.mxu0 0
    %312 = vmatprep.subr.bf16.mxu0 0
    %313 = vmatpush2.bf16.msra.mxu0 0
    %314 = vmatprep.mubr.bf16.mxu0 0
    %315 = vmatmul.mubr.bf16.gmra.mxu0 %v210
    %v316 = vpop.f32.mrf.mxu0
    %v317 = vadd.f32 %v232, %v316
    %v318 = vpop.f32.mrf.mxu0
    %v319 = vpop.f32.mrf.mxu0
    %v320 = vadd.f32 %v232, %v319
    %v321 = vpop.f32.mrf.mxu0
    %322 = vdwg.mxu0
    %v323 = vmax.f32 %v317, 0.0
    %v324 = vmax.f32 %v320, 0.0
    %v325 = vpack.c.bf16 %v324, %v323
    %v326 = vld [vmem:[#allocation6] sm:$0xf]
    %v327 = vld [vmem:[#allocation6 + $0x4] sm:$0xf]
    %v328 = vld [vmem:[#allocation6 + $0x8] sm:$0xf]
    %v329 = vld [vmem:[#allocation6 + $0xc] sm:$0xf]
    %v330 = vld [vmem:[#allocation6 + $0x10] sm:$0xf]
    %v331 = vld [vmem:[#allocation6 + $0x14] sm:$0xf]
    %v332 = vld [vmem:[#allocation6 + $0x18] sm:$0xf]
    %v333 = vld [vmem:[#allocation6 + $0x1c] sm:$0xf]
    %v334 = vld [vmem:[#allocation6 + $0x20] sm:$0xf]
    %v335 = vld [vmem:[#allocation6 + $0x24] sm:$0xf]
    %v336 = vld [vmem:[#allocation6 + $0x28] sm:$0xf]
    %v337 = vld [vmem:[#allocation6 + $0x2c] sm:$0xf]
    %v338 = vld [vmem:[#allocation6 + $0x30] sm:$0xf]
    %v339 = vld [vmem:[#allocation6 + $0x34] sm:$0xf]
    %v340 = vld [vmem:[#allocation6 + $0x38] sm:$0xf]
    %v341 = vld [vmem:[#allocation6 + $0x3c] sm:$0xf]
    %v342 = vld [vmem:[%s6] sm:$0x1]
    %v344 = vlaneseq
    %v345 = vshrl.u32 %v344, 7
    %v346 = vsub.s32 0, %v345
    %v347 = vrot.slane %v342, %v346
    %v365 = vunpack.c.l.b16 %v326
    %v366 = vunpack.c.l.b16 %v327
    %v367 = vunpack.c.l.b16 %v328
    %v368 = vunpack.c.l.b16 %v329
    %v369 = vunpack.c.l.b16 %v330
    %v370 = vunpack.c.l.b16 %v331
    %v371 = vunpack.c.l.b16 %v332
    %v372 = vunpack.c.l.b16 %v333
    %v373 = vunpack.c.l.b16 %v334
    %v374 = vunpack.c.l.b16 %v335
    %v375 = vunpack.c.l.b16 %v336
    %v376 = vunpack.c.l.b16 %v337
    %v377 = vunpack.c.l.b16 %v338
    %v378 = vunpack.c.l.b16 %v339
    %v379 = vunpack.c.l.b16 %v340
    %v380 = vunpack.c.l.b16 %v341
    %v381 = vpack.c.b16 %v366, %v365
    %v382 = vpack.c.b16 %v368, %v367
    %v383 = vpack.c.b16 %v370, %v369
    %v384 = vpack.c.b16 %v372, %v371
    %v385 = vpack.c.b16 %v374, %v373
    %v386 = vpack.c.b16 %v376, %v375
    %v387 = vpack.c.b16 %v378, %v377
    %v388 = vpack.c.b16 %v380, %v379
    %397 = vmatprep.subr.bf16.mxu0 0
    %398 = vmatpush1.bf16.msra.mxu0 %v388
    %399 = vmatprep.subr.bf16.mxu0 0
    %400 = vmatpush1.bf16.msra.mxu0 %v387
    %401 = vmatprep.subr.bf16.mxu0 0
    %402 = vmatpush1.bf16.msra.mxu0 %v386
    %403 = vmatprep.subr.bf16.mxu0 0
    %404 = vmatpush1.bf16.msra.mxu0 %v385
    %405 = vmatprep.subr.bf16.mxu0 0
    %406 = vmatpush1.bf16.msra.mxu0 %v384
    %407 = vmatprep.subr.bf16.mxu0 0
    %408 = vmatpush1.bf16.msra.mxu0 %v383
    %409 = vmatprep.subr.bf16.mxu0 0
    %410 = vmatpush1.bf16.msra.mxu0 %v382
    %411 = vmatprep.subr.bf16.mxu0 0
    %412 = vmatpush1.bf16.msra.mxu0 %v381
    %413 = vmatprep.subr.bf16.mxu0 0
    %414 = vmatpush2.bf16.msra.mxu0 0
    %415 = vmatprep.subr.bf16.mxu0 0
    %416 = vmatpush2.bf16.msra.mxu0 0
    %417 = vmatprep.subr.bf16.mxu0 0
    %418 = vmatpush2.bf16.msra.mxu0 0
    %419 = vmatprep.subr.bf16.mxu0 0
    %420 = vmatpush2.bf16.msra.mxu0 0
    %421 = vmatprep.subr.bf16.mxu0 0
    %422 = vmatpush2.bf16.msra.mxu0 0
    %423 = vmatprep.subr.bf16.mxu0 0
    %424 = vmatpush2.bf16.msra.mxu0 0
    %425 = vmatprep.subr.bf16.mxu0 0
    %426 = vmatpush2.bf16.msra.mxu0 0
    %427 = vmatprep.subr.bf16.mxu0 0
    %428 = vmatpush2.bf16.msra.mxu0 0
    %429 = vmatprep.mubr.bf16.mxu0 0
    %430 = vmatmul.mubr.bf16.gmra.mxu0 %v325
    %v431 = vpop.f32.mrf.mxu0
    %v432 = vadd.f32 %v347, %v431
    %v433 = vpop.f32.mrf.mxu0
    %v434 = vpop.f32.mrf.mxu0
    %v435 = vadd.f32 %v347, %v434
    %v436 = vpop.f32.mrf.mxu0
    %437 = vdwg.mxu0
    %v438 = vmax.f32 %v432, 0.0
    %v439 = vmax.f32 %v435, 0.0
    %v440 = vpack.c.bf16 %v439, %v438
    %v441 = vld [vmem:[#allocation7] sm:$0xf]
    %v442 = vld [vmem:[#allocation7 + $0x4] sm:$0xf]
    %v443 = vld [vmem:[#allocation7 + $0x8] sm:$0xf]
    %v444 = vld [vmem:[#allocation7 + $0xc] sm:$0xf]
    %v445 = vld [vmem:[#allocation7 + $0x10] sm:$0xf]
    %v446 = vld [vmem:[#allocation7 + $0x14] sm:$0xf]
    %v447 = vld [vmem:[#allocation7 + $0x18] sm:$0xf]
    %v448 = vld [vmem:[#allocation7 + $0x1c] sm:$0xf]
    %v449 = vld [vmem:[#allocation7 + $0x20] sm:$0xf]
    %v450 = vld [vmem:[#allocation7 + $0x24] sm:$0xf]
    %v451 = vld [vmem:[#allocation7 + $0x28] sm:$0xf]
    %v452 = vld [vmem:[#allocation7 + $0x2c] sm:$0xf]
    %v453 = vld [vmem:[#allocation7 + $0x30] sm:$0xf]
    %v454 = vld [vmem:[#allocation7 + $0x34] sm:$0xf]
    %v455 = vld [vmem:[#allocation7 + $0x38] sm:$0xf]
    %v456 = vld [vmem:[#allocation7 + $0x3c] sm:$0xf]
    %v457 = vld [vmem:[%s8] sm:$0x1]
    %v459 = vlaneseq
    %v460 = vshrl.u32 %v459, 7
    %v461 = vsub.s32 0, %v460
    %v462 = vrot.slane %v457, %v461
    %v480 = vunpack.c.l.b16 %v441
    %v481 = vunpack.c.l.b16 %v442
    %v482 = vunpack.c.l.b16 %v443
    %v483 = vunpack.c.l.b16 %v444
    %v484 = vunpack.c.l.b16 %v445
    %v485 = vunpack.c.l.b16 %v446
    %v486 = vunpack.c.l.b16 %v447
    %v487 = vunpack.c.l.b16 %v448
    %v488 = vunpack.c.l.b16 %v449
    %v489 = vunpack.c.l.b16 %v450
    %v490 = vunpack.c.l.b16 %v451
    %v491 = vunpack.c.l.b16 %v452
    %v492 = vunpack.c.l.b16 %v453
    %v493 = vunpack.c.l.b16 %v454
    %v494 = vunpack.c.l.b16 %v455
    %v495 = vunpack.c.l.b16 %v456
    %v496 = vpack.c.b16 %v481, %v480
    %v497 = vpack.c.b16 %v483, %v482
    %v498 = vpack.c.b16 %v485, %v484
    %v499 = vpack.c.b16 %v487, %v486
    %v500 = vpack.c.b16 %v489, %v488
    %v501 = vpack.c.b16 %v491, %v490
    %v502 = vpack.c.b16 %v493, %v492
    %v503 = vpack.c.b16 %v495, %v494
    %512 = vmatprep.subr.bf16.mxu0 0
    %513 = vmatpush1.bf16.msra.mxu0 %v503
    %514 = vmatprep.subr.bf16.mxu0 0
    %515 = vmatpush1.bf16.msra.mxu0 %v502
    %516 = vmatprep.subr.bf16.mxu0 0
    %517 = vmatpush1.bf16.msra.mxu0 %v501
    %518 = vmatprep.subr.bf16.mxu0 0
    %519 = vmatpush1.bf16.msra.mxu0 %v500
    %520 = vmatprep.subr.bf16.mxu0 0
    %521 = vmatpush1.bf16.msra.mxu0 %v499
    %522 = vmatprep.subr.bf16.mxu0 0
    %523 = vmatpush1.bf16.msra.mxu0 %v498
    %524 = vmatprep.subr.bf16.mxu0 0
    %525 = vmatpush1.bf16.msra.mxu0 %v497
    %526 = vmatprep.subr.bf16.mxu0 0
    %527 = vmatpush1.bf16.msra.mxu0 %v496
    %528 = vmatprep.subr.bf16.mxu0 0
    %529 = vmatpush2.bf16.msra.mxu0 0
    %530 = vmatprep.subr.bf16.mxu0 0
    %531 = vmatpush2.bf16.msra.mxu0 0
    %532 = vmatprep.subr.bf16.mxu0 0
    %533 = vmatpush2.bf16.msra.mxu0 0
    %534 = vmatprep.subr.bf16.mxu0 0
    %535 = vmatpush2.bf16.msra.mxu0 0
    %536 = vmatprep.subr.bf16.mxu0 0
    %537 = vmatpush2.bf16.msra.mxu0 0
    %538 = vmatprep.subr.bf16.mxu0 0
    %539 = vmatpush2.bf16.msra.mxu0 0
    %540 = vmatprep.subr.bf16.mxu0 0
    %541 = vmatpush2.bf16.msra.mxu0 0
    %542 = vmatprep.subr.bf16.mxu0 0
    %543 = vmatpush2.bf16.msra.mxu0 0
    %544 = vmatprep.mubr.bf16.mxu0 0
    %545 = vmatmul.mubr.bf16.gmra.mxu0 %v440
    %v546 = vpop.f32.mrf.mxu0
    %v547 = vadd.f32 %v462, %v546
    %v548 = vpop.f32.mrf.mxu0
    %v549 = vpop.f32.mrf.mxu0
    %v550 = vadd.f32 %v462, %v549
    %v551 = vpop.f32.mrf.mxu0
    %552 = vdwg.mxu0
    %553 = vst [vmem:[%s9] sm:$0xff] %v547
    %554 = vst [vmem:[%s9 + $0x8] sm:$0xff] %v550
    // Predicated region
    $region54: #{_mlp_forward_impl.1} parent=1 // pred_check
      _
    $region55: #{_mlp_forward_impl.1} parent=1 // pred_check_branch
      %556 = sbr.rel (0) target = $region57
    $region56: #{_mlp_forward_impl.1} parent=1 // pred_region
      _
    $region57: #{_mlp_forward_impl.1} parent=1 // pred_fallthru
      _
    // Predicated region
    $region58: #{_mlp_forward_impl.1} parent=1 // pred_check
      _
    $region59: #{_mlp_forward_impl.1} parent=1 // pred_check_branch
      %558 = sbr.rel (0) target = $region61
    $region60: #{_mlp_forward_impl.1} parent=1 // pred_region
      _
    $region61: #{_mlp_forward_impl.1} parent=1 // pred_fallthru
      _
    %559 = vsyncpa [#allocation3], 1
    %560 = vsyncpa [#allocation5], 1
    %561 = vsyncpa [#allocation8], 1

</llo_original>
